<compile_context>
chip_gen: v6e
topology: v6e:2x2x1
jax: 0.10.0
libtpu: 0.0.40
codegen_flags: <defaults>
</compile_context>

<pallas_src>
import jax
import jax.numpy as jnp
from jax.experimental import pallas as pl
from jax.experimental.pallas import tpu as pltpu

BN_EPS = 1e-5
LEAKY_SLOPE = 0.01  # nn.LeakyReLU default


def _round_up(x: int, m: int) -> int:
    return (x + m - 1) // m * m


def _pick_tile(n_pad: int, cap: int) -> int:
    """Largest multiple-of-128 divisor of n_pad that is <= cap (>= 128)."""
    best = 128
    t = 128
    while t <= min(cap, n_pad):
        if n_pad % t == 0:
            best = t
        t += 128
    return best


def _gcn_kernel(a_ref, y_ref, drow_ref, out_ref):
    """One (i, k) grid step of out[i] = leaky_relu(d_row[i] * sum_k A[i,k] @ Y[k]).

    a_ref    : (tm, tk)        int8  tile of A (+ self loops), values in {0,1,2}
    y_ref    : (tk, Cout_pad)  bf16  precomputed (H_bn @ W' + b') * d_col rows
    drow_ref : (tm, 1)         f32   rsqrt(degree) for the output rows
    out_ref  : (tm, Cout_pad)  f32   resident across k; doubles as accumulator
    """
    k = pl.program_id(1)

    @pl.when(k == 0)
    def _():
        out_ref[...] = jnp.zeros_like(out_ref)

    # int8 -> bf16 cast is exact for {0,1,2}; bf16 x bf16 -> f32 is the native
    # MXU path on all generations (no f32 slow path, no per-step f32 upcast).
    a = a_ref[...].astype(jnp.bfloat16)
    out_ref[...] += jnp.dot(a, y_ref[...], preferred_element_type=jnp.float32)

    @pl.when(k == pl.num_programs(1) - 1)
    def _():
        z = out_ref[...] * drow_ref[...]
        out_ref[...] = jnp.where(z >= 0, z, LEAKY_SLOPE * z)


def gcn_layer_forward(H, A_with_I, W_out_T, b_out, gamma, beta):
    """H: (N, Cin), A_with_I: (N, N), W_out_T: (Cin, Cout), b_out: (Cout,)."""
    N, Cin = H.shape
    Cout = W_out_T.shape[1]

    H = H.astype(jnp.float32)
    W = W_out_T.astype(jnp.float32)

    N_pad = _round_up(N, 128)
    Cout_pad = _round_up(Cout, 128)

    # ---- A: one cast/pad pass to int8; degree rowsum taken from the int8 copy
    # so the f32 adjacency is only read once end-to-end.
    # NOTE: int8 storage is exact only because entries are in {0, 1, 2}; gate on
    # dtype/values if upstream ever supplies a weighted / pre-normalized A.
    if N_pad != N:
        A_i8 = jnp.zeros((N_pad, N_pad), jnp.int8).at[:N, :N].set(
            A_with_I.astype(jnp.int8))
    else:
        A_i8 = A_with_I.astype(jnp.int8)
    deg = jnp.sum(A_i8, axis=1, dtype=jnp.float32)            # (N_pad,)
    d_inv = jnp.where(deg > 0, jax.lax.rsqrt(deg), 0.0)       # 0 on padded rows

    # ---- fold training-mode BatchNorm1d (biased batch stats) into the Linear,
    # then precompute Y = (H_bn @ W + b) * d_col ONCE (hoisted out of the grid).
    mean = jnp.mean(H, axis=0)
    var = jnp.mean((H - mean) ** 2, axis=0)
    scale = gamma.astype(jnp.float32) * jax.lax.rsqrt(var + BN_EPS)
    W_fold = scale[:, None] * W                                        # (Cin, Cout)
    b_fold = b_out.astype(jnp.float32) + (beta.astype(jnp.float32) - mean * scale) @ W
    Y = (H @ W_fold + b_fold) * d_inv[:N, None]                        # (N, Cout) f32

    if (N_pad, Cout_pad) != (N, Cout):
        Y_pad = jnp.zeros((N_pad, Cout_pad), jnp.bfloat16).at[:N, :Cout].set(
            Y.astype(jnp.bfloat16))
    else:
        Y_pad = Y.astype(jnp.bfloat16)
    d_row = d_inv.reshape(N_pad, 1)

    # ---- tiles: large tk amortizes the ~0.35 us per-grid-step overhead; keep
    # grid[0] >= 2 where possible so v7x's two TensorCores both get work.
    tk = _pick_tile(N_pad, 1024)
    tm = _pick_tile(N_pad, 512)
    if N_pad // tm < 2 and N_pad >= 256:
        tm = _pick_tile(N_pad, N_pad // 2)
    grid = (N_pad // tm, N_pad // tk)

    flops = 2 * N_pad * N_pad * Cout_pad
    bytes_accessed = (
        N_pad * N_pad * 1                      # A (int8), read once
        + grid[0] * N_pad * Cout_pad * 2       # Y (bf16), re-read per row tile
        + N_pad * Cout_pad * 4                 # out (f32)
        + N_pad * 4                            # d_row
    )

    out_pad = pl.pallas_call(
        _gcn_kernel,
        out_shape=jax.ShapeDtypeStruct((N_pad, Cout_pad), jnp.float32),
        grid_spec=pltpu.PrefetchScalarGridSpec(
            num_scalar_prefetch=0,
            grid=grid,
            in_specs=[
                pl.BlockSpec((tm, tk), lambda i, k: (i, k)),            # A tile
                pl.BlockSpec((tk, Cout_pad), lambda i, k: (k, 0)),      # Y k-rows
                pl.BlockSpec((tm, 1), lambda i, k: (i, 0)),             # d_row
            ],
            out_specs=pl.BlockSpec((tm, Cout_pad), lambda i, k: (i, 0)),
        ),
        compiler_params=pltpu.CompilerParams(
            dimension_semantics=("parallel", "arbitrary"),
            vmem_limit_bytes=32 * 1024 * 1024,
        ),
        cost_estimate=pl.CostEstimate(
            flops=flops, transcendentals=0, bytes_accessed=bytes_accessed),
    )(A_i8, Y_pad, d_row)

    # TODO(synk): for very large, clustered/reordered sparse graphs add a
    # scalar-prefetch block mask (P2) so the k-loop skips all-zero A tiles.
    return out_pad[:N, :Cout], A_with_I


def _reference(H, A_with_I, W_out_T, b_out, gamma, beta):
    mean = jnp.mean(H, axis=0, keepdims=True)
    var = jnp.mean((H - mean) ** 2, axis=0, keepdims=True)
    h_bn = (H - mean) / jnp.sqrt(var + BN_EPS) * gamma + beta
    d_inv = jnp.power(jnp.sum(A_with_I, axis=1), -0.5)
    a_hat = d_inv[:, None] * A_with_I * d_inv[None, :]
    y = a_hat @ (h_bn @ W_out_T + b_out)
    return jnp.where(y >= 0, y, LEAKY_SLOPE * y)


if __name__ == "__main__":
    key = jax.random.PRNGKey(0)
    N, input_dim, output_dim = 512, 32, 16   # nodes, in-features, out-features

    k_a, k_h, k_w, k_b, k_g, k_be = jax.random.split(key, 6)

    # Random symmetric 0/1 adjacency, then add self loops (A + I) as in __init__.
    a_rand = (jax.random.uniform(k_a, (N, N)) < 0.05).astype(jnp.float32)
    A = jnp.maximum(a_rand, a_rand.T)
    A_with_I = A + jnp.eye(N, dtype=jnp.float32)

    # Node features and parameters (GCN_liner_out_1 + BatchNorm1d params).
    H = jax.random.normal(k_h, (N, input_dim), dtype=jnp.float32)
    W_out_T = jax.random.normal(k_w, (input_dim, output_dim), dtype=jnp.float32) * 0.1
    b_out = jax.random.normal(k_b, (output_dim,), dtype=jnp.float32) * 0.1
    gamma = 1.0 + 0.1 * jax.random.normal(k_g, (input_dim,), dtype=jnp.float32)
    beta = 0.1 * jax.random.normal(k_be, (input_dim,), dtype=jnp.float32)

    out, A_ret = gcn_layer_forward(H, A_with_I, W_out_T, b_out, gamma, beta)
    out = jax.block_until_ready(out)

    ref = _reference(H, A_with_I, W_out_T, b_out, gamma, beta)
    assert out.shape == (N, output_dim)
    assert A_ret.shape == (N, N)
    max_err = float(jnp.max(jnp.abs(out - ref)))
    # Tolerance accounts for the bf16-quantized Y stream (A itself is exact).
    assert jnp.allclose(out, ref, atol=2e-3, rtol=2e-3), (
        f"mismatch vs reference (max abs err {max_err})")

    print("KERNEL_OK")
</pallas_src>

<mosaic_0001>
module attributes {stable_mosaic.version = 11 : i64} {
  func.func @_gcn_kernel(%arg0: i32, %arg1: i32, %arg2: memref<256x512xi8, #tpu.memory_space<vmem>>, %arg3: memref<512x128xbf16, #tpu.memory_space<vmem>>, %arg4: memref<256x1xf32, #tpu.memory_space<vmem>>, %arg5: memref<256x128xf32, #tpu.memory_space<vmem>>) attributes {dimension_semantics = [#tpu.dimension_semantics<parallel>, #tpu.dimension_semantics<arbitrary>], iteration_bounds = array<i64: 2, 1>, scalar_prefetch = 0 : i64, scratch_operands = 0 : i64, tpu.core_type = #tpu.core_type<tc>, window_params = [{transform_indices = @transform_0, window_bounds = array<i64: 256, 512>}, {transform_indices = @transform_1, window_bounds = array<i64: 512, 128>}, {transform_indices = @transform_2, window_bounds = array<i64: 256, 1>}, {transform_indices = @transform_3, window_bounds = array<i64: 256, 128>}]} {
    %c0_i32 = arith.constant 0 : i32
    %0 = arith.cmpi eq, %arg1, %c0_i32 : i32
    %1 = arith.extui %0 : i1 to i32
    %c0_i32_0 = arith.constant 0 : i32
    %2 = arith.cmpi ne, %1, %c0_i32_0 : i32
    scf.if %2 {
      %cst_10 = arith.constant 0.000000e+00 : f32
      %13 = vector.broadcast %cst_10 : f32 to vector<256x128xf32>
      %c0_11 = arith.constant 0 : index
      %c0_12 = arith.constant 0 : index
      %14 = vector.load %arg5[%c0_11, %c0_12] : memref<256x128xf32, #tpu.memory_space<vmem>>, vector<256x128xf32>
      tpu.vector_store %arg5[%c0_11, %c0_12], %13 {strides = array<i32>} : memref<256x128xf32, #tpu.memory_space<vmem>>, vector<256x128xf32>,
    } else {
    }
    %c0 = arith.constant 0 : index
    %c0_1 = arith.constant 0 : index
    %3 = vector.load %arg2[%c0, %c0_1] : memref<256x512xi8, #tpu.memory_space<vmem>>, vector<256x512xi8>
    %4 = arith.sitofp %3 : vector<256x512xi8> to vector<256x512xbf16>
    %c0_2 = arith.constant 0 : index
    %c0_3 = arith.constant 0 : index
    %5 = vector.load %arg5[%c0_2, %c0_3] : memref<256x128xf32, #tpu.memory_space<vmem>>, vector<256x128xf32>
    %c0_4 = arith.constant 0 : index
    %c0_5 = arith.constant 0 : index
    %6 = vector.load %arg3[%c0_4, %c0_5] : memref<512x128xbf16, #tpu.memory_space<vmem>>, vector<512x128xbf16>
    %cst = arith.constant dense<0.000000e+00> : vector<256x128xf32>
    %7 = tpu.matmul %4, %6, %cst {dimension_numbers = #tpu.dot_dimension_numbers<[1], [0], [0], [1], [0, 0, 1, 1], [], []>} : vector<256x512xbf16>, vector<512x128xbf16>, vector<256x128xf32> -> vector<256x128xf32>
    %8 = arith.addf %5, %7 : vector<256x128xf32>
    %c0_6 = arith.constant 0 : index
    %c0_7 = arith.constant 0 : index
    %9 = vector.load %arg5[%c0_6, %c0_7] : memref<256x128xf32, #tpu.memory_space<vmem>>, vector<256x128xf32>
    tpu.vector_store %arg5[%c0_6, %c0_7], %8 {strides = array<i32>} : memref<256x128xf32, #tpu.memory_space<vmem>>, vector<256x128xf32>,
    %c0_i32_8 = arith.constant 0 : i32
    %10 = arith.cmpi eq, %arg1, %c0_i32_8 : i32
    %11 = arith.extui %10 : i1 to i32
    %c0_i32_9 = arith.constant 0 : i32
    %12 = arith.cmpi ne, %11, %c0_i32_9 : i32
    scf.if %12 {
      %c0_10 = arith.constant 0 : index
      %c0_11 = arith.constant 0 : index
      %13 = vector.load %arg5[%c0_10, %c0_11] : memref<256x128xf32, #tpu.memory_space<vmem>>, vector<256x128xf32>
      %c0_12 = arith.constant 0 : index
      %c0_13 = arith.constant 0 : index
      %14 = vector.load %arg4[%c0_12, %c0_13] : memref<256x1xf32, #tpu.memory_space<vmem>>, vector<256x1xf32>
      %15 = vector.broadcast %14 : vector<256x1xf32> to vector<256x128xf32>
      %16 = arith.mulf %13, %15 : vector<256x128xf32>
      %cst_14 = arith.constant 0.000000e+00 : f32
      %17 = vector.broadcast %cst_14 : f32 to vector<256x128xf32>
      %18 = arith.cmpf oge, %16, %17 : vector<256x128xf32>
      %cst_15 = arith.constant 0.00999999977 : f32
      %19 = vector.broadcast %cst_15 : f32 to vector<256x128xf32>
      %20 = arith.mulf %19, %16 : vector<256x128xf32>
      %21 = arith.select %18, %16, %20 : vector<256x128xi1>, vector<256x128xf32>
      %c0_16 = arith.constant 0 : index
      %c0_17 = arith.constant 0 : index
      %22 = vector.load %arg5[%c0_16, %c0_17] : memref<256x128xf32, #tpu.memory_space<vmem>>, vector<256x128xf32>
      tpu.vector_store %arg5[%c0_16, %c0_17], %21 {strides = array<i32>} : memref<256x128xf32, #tpu.memory_space<vmem>>, vector<256x128xf32>,
    } else {
    }
    return
  }
  func.func @transform_0(%arg0: i32, %arg1: i32) -> (i32, i32) {
    %c0_i32 = arith.constant 0 : i32
    return %arg0, %arg1 : i32, i32
  }
  func.func @transform_1(%arg0: i32, %arg1: i32) -> (i32, i32) {
    %c0_i32 = arith.constant 0 : i32
    %c0_i32_0 = arith.constant 0 : i32
    return %arg1, %c0_i32 : i32, i32
  }
  func.func @transform_2(%arg0: i32, %arg1: i32) -> (i32, i32) {
    %c0_i32 = arith.constant 0 : i32
    %c0_i32_0 = arith.constant 0 : i32
    return %arg0, %c0_i32 : i32, i32
  }
  func.func @transform_3(%arg0: i32, %arg1: i32) -> (i32, i32) {
    %c0_i32 = arith.constant 0 : i32
    %c0_i32_0 = arith.constant 0 : i32
    return %arg0, %c0_i32 : i32, i32
  }
}

</mosaic_0001>

<llo_original>
// kernel: tpu_custom_call.1
$region0: #{tpu_custom_call.1}
  #allocation0 [shape = 'u32[]', space=smem, size = 0x4, offset = 0x4, fixed_abs, tag = 'smem constant byte address 0x4 - core index']
  #allocation1 [shape = 'u32[144,128]{1,0:T(1,128)}', space=vmem, size = 0x12000, scoped, tag = 'internal scratch']
  %s0 = inlined_call_operand.vmem [shape: s8[512,512], index: 0, kind: input, shape index: {}]
  %s1 = inlined_call_operand.hbm [shape: bf16[512,128], index: 1, kind: input, shape index: {}]
  %s2 = inlined_call_operand.vmem [shape: f32[512,1], index: 2, kind: input, shape index: {}]
  %s3 = inlined_call_operand.hbm [shape: f32[512,128], index: 3, kind: output, shape index: {}]
  %s4 = sld [smem:[#allocation0]]
  $region57: #{tpu_custom_call.1} parent=0
    _
  %s6 = ssub.s32 1, %s4
  %s7 = scalar_select 0, %s6, %s4
  $region1: #{tpu_custom_call.1} parent=0
    #allocation2 [shape = 'u8[131072]{0}', space=vmem, size = 0x20000, scoped, tag = 'input window, operand 1, single buffered']
    #allocation3 [shape = 's32[2]{0}', space=sflag, size = 0x8, scoped, tag = 'scoped memory for tpu_custom_call.1']
    #allocation4 [shape = 's32[2]{0}', space=sflag, size = 0x8, scoped, tag = 'scoped memory for tpu_custom_call.1']
    #allocation5 [shape = 'u8[262144]{0}', space=vmem, size = 0x40000, scoped, tag = 'output window, operand 0']
    %8 = vsyncpa [#allocation3], 0
    %9 = vsyncpa [#allocation4], 0
    %s10 = scalar_lea.sflag [#allocation4], 1
    %11 = vsyncpa %s10, 0
    loop: start=0, step=1, limit=4
    $region2: #{tpu_custom_call.1} parent=1 // loop_pre_header
      _
    $region3: #{tpu_custom_call.1} parent=1 // loop_header
      %s13 = sphi 0, %s17
      %p14 = scmp.ge.s32.totalorder %s13, 4
      %s20 = sphi 0, %s32
      %s21 = sphi 0, %s28
      %s22 = sphi 0, %s20
      %s23 = sphi 0, %s21
      %s24 = sphi 0, %s22
      %s25 = sphi 0, %s23
      %s37 = sphi 0, %s39
      %s40 = sphi 0, %s37
      %s41 = sphi 0, %s40
      %s57 = sphi 0, %s41
      %s63 = sphi 0, %s65
      %s66 = sphi 0, %s63
      %s67 = sphi 0, %s66
      %s83 = sphi 0, %s67
      %s89 = sphi 0, %s91
      %s92 = sphi 0, %s89
      %s93 = sphi 0, %s92
      %s109 = sphi 0, %s93
      %s115 = sphi 0, %s117
      %s118 = sphi 0, %s115
      %s119 = sphi 0, %s118
      %s135 = sphi 0, %s119
    $region4: #{tpu_custom_call.1} parent=1 // loop_header_branch
      %16 = sbr.rel (%p14) target = $region8
    $region5: #{tpu_custom_call.1} parent=1 // loop_body
      %s18 = ssub.s32 %s13, 1
      %s19 = ssub.s32 %s13, 2
      %s26 = sadd.s32 1, %s21
      %p27 = scmp.ge.s32.totalorder %s26, 1
      %s28 = scalar_select %p27, 0, %s26
      %s29 = sadd.s32 1, %s20
      %s30 = scalar_select %p27, %s29, %s20
      %p31 = scmp.ge.s32.totalorder %s30, 2
      %s32 = scalar_select %p31, 0, %s30
      %s33 = ssub.s32 %s20, %s32
      %s34 = ssub.s32 %s21, %s28
      %s35 = sor.u32 %s33, %s34
      %p36 = scmp.eq.s32.totalorder %s35, 0
      %s38 = sadd.s32 %s37, 1
      %s39 = scalar_select %p36, %s37, %s38
      %p42 = pneg %p36
      %p43 = scmp.eq.s32.totalorder %s13, 1
      %p44 = por %p42, %p43
      %p45 = scmp.ne.s32.totalorder %s37, %s40
      %p46 = scmp.eq.s32.totalorder %s13, 0
      %p47 = por %p45, %p46
      %p48 = scmp.ne.s32.totalorder %s37, %s40
      %p49 = scmp.eq.s32.totalorder %s18, 1
      %p50 = por %p48, %p49
      %p51 = scmp.ne.s32.totalorder %s40, %s41
      %p52 = scmp.eq.s32.totalorder %s18, 0
      %p53 = por %p51, %p52
      %p54 = scmp.ne.s32.totalorder %s40, %s41
      %p55 = scmp.eq.s32.totalorder %s19, 1
      %p56 = por %p54, %p55
      %p58 = scmp.ne.s32.totalorder %s41, %s57
      %p59 = scmp.eq.s32.totalorder %s19, 0
      %p60 = por %p58, %p59
      %s61 = ssub.s32 %s21, %s28
      %p62 = scmp.eq.s32.totalorder %s61, 0
      %s64 = sadd.s32 %s63, 1
      %s65 = scalar_select %p62, %s63, %s64
      %p68 = pneg %p62
      %p69 = scmp.eq.s32.totalorder %s13, 1
      %p70 = por %p68, %p69
      %p71 = scmp.ne.s32.totalorder %s63, %s66
      %p72 = scmp.eq.s32.totalorder %s13, 0
      %p73 = por %p71, %p72
      %p74 = scmp.ne.s32.totalorder %s63, %s66
      %p75 = scmp.eq.s32.totalorder %s18, 1
      %p76 = por %p74, %p75
      %p77 = scmp.ne.s32.totalorder %s66, %s67
      %p78 = scmp.eq.s32.totalorder %s18, 0
      %p79 = por %p77, %p78
      %p80 = scmp.ne.s32.totalorder %s66, %s67
      %p81 = scmp.eq.s32.totalorder %s19, 1
      %p82 = por %p80, %p81
      %p84 = scmp.ne.s32.totalorder %s67, %s83
      %p85 = scmp.eq.s32.totalorder %s19, 0
      %p86 = por %p84, %p85
      %s87 = ssub.s32 %s20, %s32
      %p88 = scmp.eq.s32.totalorder %s87, 0
      %s90 = sadd.s32 %s89, 1
      %s91 = scalar_select %p88, %s89, %s90
      %p94 = pneg %p88
      %p95 = scmp.eq.s32.totalorder %s13, 1
      %p96 = por %p94, %p95
      %p97 = scmp.ne.s32.totalorder %s89, %s92
      %p98 = scmp.eq.s32.totalorder %s13, 0
      %p99 = por %p97, %p98
      %p100 = scmp.ne.s32.totalorder %s89, %s92
      %p101 = scmp.eq.s32.totalorder %s18, 1
      %p102 = por %p100, %p101
      %p103 = scmp.ne.s32.totalorder %s92, %s93
      %p104 = scmp.eq.s32.totalorder %s18, 0
      %p105 = por %p103, %p104
      %p106 = scmp.ne.s32.totalorder %s92, %s93
      %p107 = scmp.eq.s32.totalorder %s19, 1
      %p108 = por %p106, %p107
      %p110 = scmp.ne.s32.totalorder %s93, %s109
      %p111 = scmp.eq.s32.totalorder %s19, 0
      %p112 = por %p110, %p111
      %s113 = ssub.s32 %s20, %s32
      %p114 = scmp.eq.s32.totalorder %s113, 0
      %s116 = sadd.s32 %s115, 1
      %s117 = scalar_select %p114, %s115, %s116
      %p120 = pneg %p114
      %p121 = scmp.eq.s32.totalorder %s13, 1
      %p122 = por %p120, %p121
      %p123 = scmp.ne.s32.totalorder %s115, %s118
      %p124 = scmp.eq.s32.totalorder %s13, 0
      %p125 = por %p123, %p124
      %p126 = scmp.ne.s32.totalorder %s115, %s118
      %p127 = scmp.eq.s32.totalorder %s18, 1
      %p128 = por %p126, %p127
      %p129 = scmp.ne.s32.totalorder %s118, %s119
      %p130 = scmp.eq.s32.totalorder %s18, 0
      %p131 = por %p129, %p130
      %p132 = scmp.ne.s32.totalorder %s118, %s119
      %p133 = scmp.eq.s32.totalorder %s19, 1
      %p134 = por %p132, %p133
      %p136 = scmp.ne.s32.totalorder %s119, %s135
      %p137 = scmp.eq.s32.totalorder %s19, 0
      %p138 = por %p136, %p137
      %p139 = scmp.le.s32.totalorder 1, %s13
      %p140 = scmp.lt.s32.totalorder %s13, 3
      %p141 = pnand %p139, %p140
      %p142 = pneg %p141
      // Predicated region
      $region9: #{tpu_custom_call.1} parent=5 // pred_check
        _
      $region10: #{tpu_custom_call.1} parent=5 // pred_check_branch
        %144 = sbr.rel (%p141) target = $region12
      $region11: #{tpu_custom_call.1} parent=5 // pred_region
        %s145 = ssub.s32 %s13, 1
        // Predicated region
        $region13: #{tpu_custom_call.1} parent=11 // pred_check
          %p146 = pneg %p79
        $region14: #{tpu_custom_call.1} parent=11 // pred_check_branch
          %148 = sbr.rel (%p146) target = $region16
        $region15: #{tpu_custom_call.1} parent=11 // pred_region
          %s149 = smul.u32 64, %s23
          %s151 = ssub.s32 4096, 4096
          %152 = vsyncadd [#allocation3], %s151
          %s153 = smul.addr %s149, 64
          %s154 = scalar_lea.hbm %s1, %s153
          %s155 = sshll.u32 [#allocation2], 4
          %s156 = int_to_ptr.vmem [resolvable:$true] %s155
          %161 = dma.hbm_to_vmem [thread:$0]  %s154, 4096, %s156, [#allocation3], 64, 64, 4
        $region16: #{tpu_custom_call.1} parent=11 // pred_fallthru
          _
      $region12: #{tpu_custom_call.1} parent=5 // pred_fallthru
        _
      %p162 = scmp.lt.s32.totalorder %s13, 2
      // Predicated region
      $region17: #{tpu_custom_call.1} parent=5 // pred_check
        %p163 = pneg %p162
      $region18: #{tpu_custom_call.1} parent=5 // pred_check_branch
        %165 = sbr.rel (%p163) target = $region20
      $region19: #{tpu_custom_call.1} parent=5 // pred_region
        // Predicated region
        $region21: #{tpu_custom_call.1} parent=19 // pred_check
          %p166 = pneg %p47
        $region22: #{tpu_custom_call.1} parent=19 // pred_check_branch
          %168 = sbr.rel (%p166) target = $region24
        $region23: #{tpu_custom_call.1} parent=19 // pred_region
          %s169 = smul.u32 8, %s20
          %s170 = smul.u32 4, %s21
          %p171 = scmp.lt.s32.totalorder %s169, 15
          %s172 = scalar_select %p171, %s169, 15
          %p173 = scmp.lt.s32.totalorder %s170, 3
          %s174 = scalar_select %p173, %s170, 3
          %s175 = smul.addr %s172, 4
          %s176 = sadd.s32 %s174, %s175
          %s177 = smul.addr %s176, 8
          %s178 = scalar_lea.vmem %s0, %s177
          %s179 = smul.u32 8, %s20
          %s180 = smul.u32 4, %s21
        $region24: #{tpu_custom_call.1} parent=19 // pred_fallthru
          _
        // Predicated region
        $region25: #{tpu_custom_call.1} parent=19 // pred_check
          %p181 = pneg %p99
        $region26: #{tpu_custom_call.1} parent=19 // pred_check_branch
          %183 = sbr.rel (%p181) target = $region28
        $region27: #{tpu_custom_call.1} parent=19 // pred_region
          %s184 = smul.u32 32, %s20
          %p185 = scmp.lt.s32.totalorder %s184, 63
          %s186 = scalar_select %p185, %s184, 63
          %s187 = smul.addr %s186, 8
          %s188 = scalar_lea.vmem %s2, %s187
          %s189 = smul.u32 32, %s20
        $region28: #{tpu_custom_call.1} parent=19 // pred_fallthru
          _
      $region20: #{tpu_custom_call.1} parent=5 // pred_fallthru
        _
      %p190 = scmp.le.s32.totalorder 1, %s13
      %p191 = scmp.lt.s32.totalorder %s13, 3
      %p192 = pnand %p190, %p191
      %p193 = pneg %p192
      // Predicated region
      $region29: #{tpu_custom_call.1} parent=5 // pred_check
        _
      $region30: #{tpu_custom_call.1} parent=5 // pred_check_branch
        %195 = sbr.rel (%p192) target = $region32
      $region31: #{tpu_custom_call.1} parent=5 // pred_region
        %s196 = ssub.s32 %s13, 1
        // Predicated region
        $region33: #{tpu_custom_call.1} parent=31 // pred_check
          %p197 = pneg %p79
        $region34: #{tpu_custom_call.1} parent=31 // pred_check_branch
          %199 = sbr.rel (%p197) target = $region36
        $region35: #{tpu_custom_call.1} parent=31 // pred_region
          %200 = dma.done [#allocation3], 4096
        $region36: #{tpu_custom_call.1} parent=31 // pred_fallthru
          _
        %s201 = smul.u32 8, %s22
        %s202 = smul.u32 4, %s23
        %p203 = scmp.lt.s32.totalorder %s201, 15
        %s204 = scalar_select %p203, %s201, 15
        %p205 = scmp.lt.s32.totalorder %s202, 3
        %s206 = scalar_select %p205, %s202, 3
        %s207 = smul.addr %s204, 4
        %s208 = sadd.s32 %s206, %s207
        %s209 = smul.addr %s208, 8
        %s210 = scalar_lea.vmem %s0, %s209
        %p211 = pneg %p53
        %p212 = pneg %p50
        %p213 = pneg %p79
        %p214 = pneg %p76
        %s215 = smul.u32 32, %s22
        %p216 = scmp.lt.s32.totalorder %s215, 63
        %s217 = scalar_select %p216, %s215, 63
        %s218 = smul.addr %s217, 8
        %s219 = scalar_lea.vmem %s2, %s218
        %p220 = pneg %p105
        %p221 = pneg %p102
        %p222 = pneg %p131
        %p223 = pneg %p128
        %s224 = sand.u32 %s118, 1
        %s225 = scalar_lea.sflag [#allocation4], %s224
        %s226 = sand.u32 %s118, 1
        %s227 = smul.addr %s226, 256
        %s228 = scalar_lea.vmem [#allocation5], %s227
        %s229 = smul.u32 8, %s22
        %s230 = smul.u32 4, %s23
        %p231 = scmp.lt.s32.totalorder %s229, 15
        %s232 = scalar_select %p231, %s229, 15
        %p233 = scmp.lt.s32.totalorder %s230, 3
        %s234 = scalar_select %p233, %s230, 3
        %s235 = smul.addr %s232, 4
        %s236 = sadd.s32 %s234, %s235
        %s237 = smul.addr %s236, 8
        %s238 = scalar_lea.vmem %s0, %s237
        %s239 = smul.u32 8, %s22
        %s240 = smul.u32 4, %s23
        %s241 = smul.u32 64, %s23
        %s242 = smul.u32 32, %s22
        %p243 = scmp.lt.s32.totalorder %s242, 63
        %s244 = scalar_select %p243, %s242, 63
        %s245 = smul.addr %s244, 8
        %s246 = scalar_lea.vmem %s2, %s245
        %s247 = smul.u32 32, %s22
        %s248 = smul.u32 32, %s22
        %p250 = scmp.eq.s32.totalorder %s23, 0
        // Predicated region
        $region37: #{tpu_custom_call.1} parent=31 // pred_check
          %p251 = pneg %p250
        $region38: #{tpu_custom_call.1} parent=31 // pred_check_branch
          %253 = sbr.rel (%p251) target = $region40
        $region39: #{tpu_custom_call.1} parent=31 // pred_region
          %254 = vst [vmem:[%s228] sm:$0xff] 0.0
          %255 = vst [vmem:[%s228 + $0x8] sm:$0xff] 0.0
          %256 = vst [vmem:[%s228 + $0x10] sm:$0xff] 0.0
          %257 = vst [vmem:[%s228 + $0x18] sm:$0xff] 0.0
          %258 = vst [vmem:[%s228 + $0x20] sm:$0xff] 0.0
          %259 = vst [vmem:[%s228 + $0x28] sm:$0xff] 0.0
          %260 = vst [vmem:[%s228 + $0x30] sm:$0xff] 0.0
          %261 = vst [vmem:[%s228 + $0x38] sm:$0xff] 0.0
          %262 = vst [vmem:[%s228 + $0x40] sm:$0xff] 0.0
          %263 = vst [vmem:[%s228 + $0x48] sm:$0xff] 0.0
          %264 = vst [vmem:[%s228 + $0x50] sm:$0xff] 0.0
          %265 = vst [vmem:[%s228 + $0x58] sm:$0xff] 0.0
          %266 = vst [vmem:[%s228 + $0x60] sm:$0xff] 0.0
          %267 = vst [vmem:[%s228 + $0x68] sm:$0xff] 0.0
          %268 = vst [vmem:[%s228 + $0x70] sm:$0xff] 0.0
          %269 = vst [vmem:[%s228 + $0x78] sm:$0xff] 0.0
          %270 = vst [vmem:[%s228 + $0x80] sm:$0xff] 0.0
          %271 = vst [vmem:[%s228 + $0x88] sm:$0xff] 0.0
          %272 = vst [vmem:[%s228 + $0x90] sm:$0xff] 0.0
          %273 = vst [vmem:[%s228 + $0x98] sm:$0xff] 0.0
          %274 = vst [vmem:[%s228 + $0xa0] sm:$0xff] 0.0
          %275 = vst [vmem:[%s228 + $0xa8] sm:$0xff] 0.0
          %276 = vst [vmem:[%s228 + $0xb0] sm:$0xff] 0.0
          %277 = vst [vmem:[%s228 + $0xb8] sm:$0xff] 0.0
          %278 = vst [vmem:[%s228 + $0xc0] sm:$0xff] 0.0
          %279 = vst [vmem:[%s228 + $0xc8] sm:$0xff] 0.0
          %280 = vst [vmem:[%s228 + $0xd0] sm:$0xff] 0.0
          %281 = vst [vmem:[%s228 + $0xd8] sm:$0xff] 0.0
          %282 = vst [vmem:[%s228 + $0xe0] sm:$0xff] 0.0
          %283 = vst [vmem:[%s228 + $0xe8] sm:$0xff] 0.0
          %284 = vst [vmem:[%s228 + $0xf0] sm:$0xff] 0.0
          %285 = vst [vmem:[%s228 + $0xf8] sm:$0xff] 0.0
        $region40: #{tpu_custom_call.1} parent=31 // pred_fallthru
          _
        %v286 = vld [vmem:[%s238] sm:$0xff]
        %v287 = vld [vmem:[%s238 + $0x8] sm:$0xff]
        %v288 = vld [vmem:[%s238 + $0x10] sm:$0xff]
        %v289 = vld [vmem:[%s238 + $0x18] sm:$0xff]
        %v290 = vld [vmem:[%s238 + $0x20] sm:$0xff]
        %v291 = vld [vmem:[%s238 + $0x28] sm:$0xff]
        %v292 = vld [vmem:[%s238 + $0x30] sm:$0xff]
        %v293 = vld [vmem:[%s238 + $0x38] sm:$0xff]
        %v294 = vld [vmem:[%s238 + $0x40] sm:$0xff]
        %v295 = vld [vmem:[%s238 + $0x48] sm:$0xff]
        %v296 = vld [vmem:[%s238 + $0x50] sm:$0xff]
        %v297 = vld [vmem:[%s238 + $0x58] sm:$0xff]
        %v298 = vld [vmem:[%s238 + $0x60] sm:$0xff]
        %v299 = vld [vmem:[%s238 + $0x68] sm:$0xff]
        %v300 = vld [vmem:[%s238 + $0x70] sm:$0xff]
        %v301 = vld [vmem:[%s238 + $0x78] sm:$0xff]
        %v302 = vld [vmem:[%s238 + $0x80] sm:$0xff]
        %v303 = vld [vmem:[%s238 + $0x88] sm:$0xff]
        %v304 = vld [vmem:[%s238 + $0x90] sm:$0xff]
        %v305 = vld [vmem:[%s238 + $0x98] sm:$0xff]
        %v306 = vld [vmem:[%s238 + $0xa0] sm:$0xff]
        %v307 = vld [vmem:[%s238 + $0xa8] sm:$0xff]
        %v308 = vld [vmem:[%s238 + $0xb0] sm:$0xff]
        %v309 = vld [vmem:[%s238 + $0xb8] sm:$0xff]
        %v310 = vld [vmem:[%s238 + $0xc0] sm:$0xff]
        %v311 = vld [vmem:[%s238 + $0xc8] sm:$0xff]
        %v312 = vld [vmem:[%s238 + $0xd0] sm:$0xff]
        %v313 = vld [vmem:[%s238 + $0xd8] sm:$0xff]
        %v314 = vld [vmem:[%s238 + $0xe0] sm:$0xff]
        %v315 = vld [vmem:[%s238 + $0xe8] sm:$0xff]
        %v316 = vld [vmem:[%s238 + $0xf0] sm:$0xff]
        %v317 = vld [vmem:[%s238 + $0xf8] sm:$0xff]
        %v318 = vunpack.c.l.s8.bf16 %v286
        %v319 = vunpack.c.l.s8.bf16 %v287
        %v320 = vunpack.c.l.s8.bf16 %v288
        %v321 = vunpack.c.l.s8.bf16 %v289
        %v322 = vunpack.c.h.s8.bf16 %v286
        %v323 = vunpack.c.h.s8.bf16 %v287
        %v324 = vunpack.c.h.s8.bf16 %v288
        %v325 = vunpack.c.h.s8.bf16 %v289
        %v326 = vunpack.c.l.s8.bf16 %v290
        %v327 = vunpack.c.l.s8.bf16 %v291
        %v328 = vunpack.c.l.s8.bf16 %v292
        %v329 = vunpack.c.l.s8.bf16 %v293
        %v330 = vunpack.c.h.s8.bf16 %v290
        %v331 = vunpack.c.h.s8.bf16 %v291
        %v332 = vunpack.c.h.s8.bf16 %v292
        %v333 = vunpack.c.h.s8.bf16 %v293
        %v334 = vunpack.c.l.s8.bf16 %v294
        %v335 = vunpack.c.l.s8.bf16 %v295
        %v336 = vunpack.c.l.s8.bf16 %v296
        %v337 = vunpack.c.l.s8.bf16 %v297
        %v338 = vunpack.c.h.s8.bf16 %v294
        %v339 = vunpack.c.h.s8.bf16 %v295
        %v340 = vunpack.c.h.s8.bf16 %v296
        %v341 = vunpack.c.h.s8.bf16 %v297
        %v342 = vunpack.c.l.s8.bf16 %v298
        %v343 = vunpack.c.l.s8.bf16 %v299
        %v344 = vunpack.c.l.s8.bf16 %v300
        %v345 = vunpack.c.l.s8.bf16 %v301
        %v346 = vunpack.c.h.s8.bf16 %v298
        %v347 = vunpack.c.h.s8.bf16 %v299
        %v348 = vunpack.c.h.s8.bf16 %v300
        %v349 = vunpack.c.h.s8.bf16 %v301
        %v350 = vunpack.c.l.s8.bf16 %v302
        %v351 = vunpack.c.l.s8.bf16 %v303
        %v352 = vunpack.c.l.s8.bf16 %v304
        %v353 = vunpack.c.l.s8.bf16 %v305
        %v354 = vunpack.c.h.s8.bf16 %v302
        %v355 = vunpack.c.h.s8.bf16 %v303
        %v356 = vunpack.c.h.s8.bf16 %v304
        %v357 = vunpack.c.h.s8.bf16 %v305
        %v358 = vunpack.c.l.s8.bf16 %v306
        %v359 = vunpack.c.l.s8.bf16 %v307
        %v360 = vunpack.c.l.s8.bf16 %v308
        %v361 = vunpack.c.l.s8.bf16 %v309
        %v362 = vunpack.c.h.s8.bf16 %v306
        %v363 = vunpack.c.h.s8.bf16 %v307
        %v364 = vunpack.c.h.s8.bf16 %v308
        %v365 = vunpack.c.h.s8.bf16 %v309
        %v366 = vunpack.c.l.s8.bf16 %v310
        %v367 = vunpack.c.l.s8.bf16 %v311
        %v368 = vunpack.c.l.s8.bf16 %v312
        %v369 = vunpack.c.l.s8.bf16 %v313
        %v370 = vunpack.c.h.s8.bf16 %v310
        %v371 = vunpack.c.h.s8.bf16 %v311
        %v372 = vunpack.c.h.s8.bf16 %v312
        %v373 = vunpack.c.h.s8.bf16 %v313
        %v374 = vunpack.c.l.s8.bf16 %v314
        %v375 = vunpack.c.l.s8.bf16 %v315
        %v376 = vunpack.c.l.s8.bf16 %v316
        %v377 = vunpack.c.l.s8.bf16 %v317
        %v378 = vunpack.c.h.s8.bf16 %v314
        %v379 = vunpack.c.h.s8.bf16 %v315
        %v380 = vunpack.c.h.s8.bf16 %v316
        %v381 = vunpack.c.h.s8.bf16 %v317
        %v382 = vld [vmem:[%s228] sm:$0xff]
        %v383 = vld [vmem:[%s228 + $0x8] sm:$0xff]
        %v384 = vld [vmem:[%s228 + $0x10] sm:$0xff]
        %v385 = vld [vmem:[%s228 + $0x18] sm:$0xff]
        %v386 = vld [vmem:[%s228 + $0x20] sm:$0xff]
        %v387 = vld [vmem:[%s228 + $0x28] sm:$0xff]
        %v388 = vld [vmem:[%s228 + $0x30] sm:$0xff]
        %v389 = vld [vmem:[%s228 + $0x38] sm:$0xff]
        %v390 = vld [vmem:[%s228 + $0x40] sm:$0xff]
        %v391 = vld [vmem:[%s228 + $0x48] sm:$0xff]
        %v392 = vld [vmem:[%s228 + $0x50] sm:$0xff]
        %v393 = vld [vmem:[%s228 + $0x58] sm:$0xff]
        %v394 = vld [vmem:[%s228 + $0x60] sm:$0xff]
        %v395 = vld [vmem:[%s228 + $0x68] sm:$0xff]
        %v396 = vld [vmem:[%s228 + $0x70] sm:$0xff]
        %v397 = vld [vmem:[%s228 + $0x78] sm:$0xff]
        %v398 = vld [vmem:[%s228 + $0x80] sm:$0xff]
        %v399 = vld [vmem:[%s228 + $0x88] sm:$0xff]
        %v400 = vld [vmem:[%s228 + $0x90] sm:$0xff]
        %v401 = vld [vmem:[%s228 + $0x98] sm:$0xff]
        %v402 = vld [vmem:[%s228 + $0xa0] sm:$0xff]
        %v403 = vld [vmem:[%s228 + $0xa8] sm:$0xff]
        %v404 = vld [vmem:[%s228 + $0xb0] sm:$0xff]
        %v405 = vld [vmem:[%s228 + $0xb8] sm:$0xff]
        %v406 = vld [vmem:[%s228 + $0xc0] sm:$0xff]
        %v407 = vld [vmem:[%s228 + $0xc8] sm:$0xff]
        %v408 = vld [vmem:[%s228 + $0xd0] sm:$0xff]
        %v409 = vld [vmem:[%s228 + $0xd8] sm:$0xff]
        %v410 = vld [vmem:[%s228 + $0xe0] sm:$0xff]
        %v411 = vld [vmem:[%s228 + $0xe8] sm:$0xff]
        %v412 = vld [vmem:[%s228 + $0xf0] sm:$0xff]
        %v413 = vld [vmem:[%s228 + $0xf8] sm:$0xff]
        %v414 = vld [vmem:[#allocation2] sm:$0xf]
        %v415 = vld [vmem:[#allocation2 + $0x4] sm:$0xf]
        %v416 = vld [vmem:[#allocation2 + $0x8] sm:$0xf]
        %v417 = vld [vmem:[#allocation2 + $0xc] sm:$0xf]
        %v418 = vld [vmem:[#allocation2 + $0x10] sm:$0xf]
        %v419 = vld [vmem:[#allocation2 + $0x14] sm:$0xf]
        %v420 = vld [vmem:[#allocation2 + $0x18] sm:$0xf]
        %v421 = vld [vmem:[#allocation2 + $0x1c] sm:$0xf]
        %v422 = vld [vmem:[#allocation2 + $0x20] sm:$0xf]
        %v423 = vld [vmem:[#allocation2 + $0x24] sm:$0xf]
        %v424 = vld [vmem:[#allocation2 + $0x28] sm:$0xf]
        %v425 = vld [vmem:[#allocation2 + $0x2c] sm:$0xf]
        %v426 = vld [vmem:[#allocation2 + $0x30] sm:$0xf]
        %v427 = vld [vmem:[#allocation2 + $0x34] sm:$0xf]
        %v428 = vld [vmem:[#allocation2 + $0x38] sm:$0xf]
        %v429 = vld [vmem:[#allocation2 + $0x3c] sm:$0xf]
        %v430 = vld [vmem:[#allocation2 + $0x40] sm:$0xf]
        %v431 = vld [vmem:[#allocation2 + $0x44] sm:$0xf]
        %v432 = vld [vmem:[#allocation2 + $0x48] sm:$0xf]
        %v433 = vld [vmem:[#allocation2 + $0x4c] sm:$0xf]
        %v434 = vld [vmem:[#allocation2 + $0x50] sm:$0xf]
        %v435 = vld [vmem:[#allocation2 + $0x54] sm:$0xf]
        %v436 = vld [vmem:[#allocation2 + $0x58] sm:$0xf]
        %v437 = vld [vmem:[#allocation2 + $0x5c] sm:$0xf]
        %v438 = vld [vmem:[#allocation2 + $0x60] sm:$0xf]
        %v439 = vld [vmem:[#allocation2 + $0x64] sm:$0xf]
        %v440 = vld [vmem:[#allocation2 + $0x68] sm:$0xf]
        %v441 = vld [vmem:[#allocation2 + $0x6c] sm:$0xf]
        %v442 = vld [vmem:[#allocation2 + $0x70] sm:$0xf]
        %v443 = vld [vmem:[#allocation2 + $0x74] sm:$0xf]
        %v444 = vld [vmem:[#allocation2 + $0x78] sm:$0xf]
        %v445 = vld [vmem:[#allocation2 + $0x7c] sm:$0xf]
        %v446 = vld [vmem:[#allocation2 + $0x80] sm:$0xf]
        %v447 = vld [vmem:[#allocation2 + $0x84] sm:$0xf]
        %v448 = vld [vmem:[#allocation2 + $0x88] sm:$0xf]
        %v449 = vld [vmem:[#allocation2 + $0x8c] sm:$0xf]
        %v450 = vld [vmem:[#allocation2 + $0x90] sm:$0xf]
        %v451 = vld [vmem:[#allocation2 + $0x94] sm:$0xf]
        %v452 = vld [vmem:[#allocation2 + $0x98] sm:$0xf]
        %v453 = vld [vmem:[#allocation2 + $0x9c] sm:$0xf]
        %v454 = vld [vmem:[#allocation2 + $0xa0] sm:$0xf]
        %v455 = vld [vmem:[#allocation2 + $0xa4] sm:$0xf]
        %v456 = vld [vmem:[#allocation2 + $0xa8] sm:$0xf]
        %v457 = vld [vmem:[#allocation2 + $0xac] sm:$0xf]
        %v458 = vld [vmem:[#allocation2 + $0xb0] sm:$0xf]
        %v459 = vld [vmem:[#allocation2 + $0xb4] sm:$0xf]
        %v460 = vld [vmem:[#allocation2 + $0xb8] sm:$0xf]
        %v461 = vld [vmem:[#allocation2 + $0xbc] sm:$0xf]
        %v462 = vld [vmem:[#allocation2 + $0xc0] sm:$0xf]
        %v463 = vld [vmem:[#allocation2 + $0xc4] sm:$0xf]
        %v464 = vld [vmem:[#allocation2 + $0xc8] sm:$0xf]
        %v465 = vld [vmem:[#allocation2 + $0xcc] sm:$0xf]
        %v466 = vld [vmem:[#allocation2 + $0xd0] sm:$0xf]
        %v467 = vld [vmem:[#allocation2 + $0xd4] sm:$0xf]
        %v468 = vld [vmem:[#allocation2 + $0xd8] sm:$0xf]
        %v469 = vld [vmem:[#allocation2 + $0xdc] sm:$0xf]
        %v470 = vld [vmem:[#allocation2 + $0xe0] sm:$0xf]
        %v471 = vld [vmem:[#allocation2 + $0xe4] sm:$0xf]
        %v472 = vld [vmem:[#allocation2 + $0xe8] sm:$0xf]
        %v473 = vld [vmem:[#allocation2 + $0xec] sm:$0xf]
        %v474 = vld [vmem:[#allocation2 + $0xf0] sm:$0xf]
        %v475 = vld [vmem:[#allocation2 + $0xf4] sm:$0xf]
        %v476 = vld [vmem:[#allocation2 + $0xf8] sm:$0xf]
        %v477 = vld [vmem:[#allocation2 + $0xfc] sm:$0xf]
        %v542 = vunpack.c.l.b16 %v414
        %v543 = vunpack.c.l.b16 %v415
        %v544 = vunpack.c.l.b16 %v416
        %v545 = vunpack.c.l.b16 %v417
        %v546 = vunpack.c.l.b16 %v418
        %v547 = vunpack.c.l.b16 %v419
        %v548 = vunpack.c.l.b16 %v420
        %v549 = vunpack.c.l.b16 %v421
        %v550 = vunpack.c.l.b16 %v422
        %v551 = vunpack.c.l.b16 %v423
        %v552 = vunpack.c.l.b16 %v424
        %v553 = vunpack.c.l.b16 %v425
        %v554 = vunpack.c.l.b16 %v426
        %v555 = vunpack.c.l.b16 %v427
        %v556 = vunpack.c.l.b16 %v428
        %v557 = vunpack.c.l.b16 %v429
        %v558 = vunpack.c.l.b16 %v430
        %v559 = vunpack.c.l.b16 %v431
        %v560 = vunpack.c.l.b16 %v432
        %v561 = vunpack.c.l.b16 %v433
        %v562 = vunpack.c.l.b16 %v434
        %v563 = vunpack.c.l.b16 %v435
        %v564 = vunpack.c.l.b16 %v436
        %v565 = vunpack.c.l.b16 %v437
        %v566 = vunpack.c.l.b16 %v438
        %v567 = vunpack.c.l.b16 %v439
        %v568 = vunpack.c.l.b16 %v440
        %v569 = vunpack.c.l.b16 %v441
        %v570 = vunpack.c.l.b16 %v442
        %v571 = vunpack.c.l.b16 %v443
        %v572 = vunpack.c.l.b16 %v444
        %v573 = vunpack.c.l.b16 %v445
        %v574 = vunpack.c.l.b16 %v446
        %v575 = vunpack.c.l.b16 %v447
        %v576 = vunpack.c.l.b16 %v448
        %v577 = vunpack.c.l.b16 %v449
        %v578 = vunpack.c.l.b16 %v450
        %v579 = vunpack.c.l.b16 %v451
        %v580 = vunpack.c.l.b16 %v452
        %v581 = vunpack.c.l.b16 %v453
        %v582 = vunpack.c.l.b16 %v454
        %v583 = vunpack.c.l.b16 %v455
        %v584 = vunpack.c.l.b16 %v456
        %v585 = vunpack.c.l.b16 %v457
        %v586 = vunpack.c.l.b16 %v458
        %v587 = vunpack.c.l.b16 %v459
        %v588 = vunpack.c.l.b16 %v460
        %v589 = vunpack.c.l.b16 %v461
        %v590 = vunpack.c.l.b16 %v462
        %v591 = vunpack.c.l.b16 %v463
        %v592 = vunpack.c.l.b16 %v464
        %v593 = vunpack.c.l.b16 %v465
        %v594 = vunpack.c.l.b16 %v466
        %v595 = vunpack.c.l.b16 %v467
        %v596 = vunpack.c.l.b16 %v468
        %v597 = vunpack.c.l.b16 %v469
        %v598 = vunpack.c.l.b16 %v470
        %v599 = vunpack.c.l.b16 %v471
        %v600 = vunpack.c.l.b16 %v472
        %v601 = vunpack.c.l.b16 %v473
        %v602 = vunpack.c.l.b16 %v474
        %v603 = vunpack.c.l.b16 %v475
        %v604 = vunpack.c.l.b16 %v476
        %v605 = vunpack.c.l.b16 %v477
        %v606 = vpack.c.b16 %v543, %v542
        %v607 = vpack.c.b16 %v545, %v544
        %v608 = vpack.c.b16 %v547, %v546
        %v609 = vpack.c.b16 %v549, %v548
        %v610 = vpack.c.b16 %v551, %v550
        %v611 = vpack.c.b16 %v553, %v552
        %v612 = vpack.c.b16 %v555, %v554
        %v613 = vpack.c.b16 %v557, %v556
        %v614 = vpack.c.b16 %v559, %v558
        %v615 = vpack.c.b16 %v561, %v560
        %v616 = vpack.c.b16 %v563, %v562
        %v617 = vpack.c.b16 %v565, %v564
        %v618 = vpack.c.b16 %v567, %v566
        %v619 = vpack.c.b16 %v569, %v568
        %v620 = vpack.c.b16 %v571, %v570
        %v621 = vpack.c.b16 %v573, %v572
        %v622 = vpack.c.b16 %v575, %v574
        %v623 = vpack.c.b16 %v577, %v576
        %v624 = vpack.c.b16 %v579, %v578
        %v625 = vpack.c.b16 %v581, %v580
        %v626 = vpack.c.b16 %v583, %v582
        %v627 = vpack.c.b16 %v585, %v584
        %v628 = vpack.c.b16 %v587, %v586
        %v629 = vpack.c.b16 %v589, %v588
        %v630 = vpack.c.b16 %v591, %v590
        %v631 = vpack.c.b16 %v593, %v592
        %v632 = vpack.c.b16 %v595, %v594
        %v633 = vpack.c.b16 %v597, %v596
        %v634 = vpack.c.b16 %v599, %v598
        %v635 = vpack.c.b16 %v601, %v600
        %v636 = vpack.c.b16 %v603, %v602
        %v637 = vpack.c.b16 %v605, %v604
        %670 = vmatprep.subr.bf16.mxu0 0
        %671 = vmatpush1.bf16.msra.mxu0 %v613
        %672 = vmatprep.subr.bf16.mxu0 0
        %673 = vmatpush1.bf16.msra.mxu0 %v612
        %674 = vmatprep.subr.bf16.mxu0 0
        %675 = vmatpush1.bf16.msra.mxu0 %v611
        %676 = vmatprep.subr.bf16.mxu0 0
        %677 = vmatpush1.bf16.msra.mxu0 %v610
        %678 = vmatprep.subr.bf16.mxu0 0
        %679 = vmatpush1.bf16.msra.mxu0 %v609
        %680 = vmatprep.subr.bf16.mxu0 0
        %681 = vmatpush1.bf16.msra.mxu0 %v608
        %682 = vmatprep.subr.bf16.mxu0 0
        %683 = vmatpush1.bf16.msra.mxu0 %v607
        %684 = vmatprep.subr.bf16.mxu0 0
        %685 = vmatpush1.bf16.msra.mxu0 %v606
        %686 = vmatprep.subr.bf16.mxu0 0
        %687 = vmatpush2.bf16.msra.mxu0 %v621
        %688 = vmatprep.subr.bf16.mxu0 0
        %689 = vmatpush2.bf16.msra.mxu0 %v620
        %690 = vmatprep.subr.bf16.mxu0 0
        %691 = vmatpush2.bf16.msra.mxu0 %v619
        %692 = vmatprep.subr.bf16.mxu0 0
        %693 = vmatpush2.bf16.msra.mxu0 %v618
        %694 = vmatprep.subr.bf16.mxu0 0
        %695 = vmatpush2.bf16.msra.mxu0 %v617
        %696 = vmatprep.subr.bf16.mxu0 0
        %697 = vmatpush2.bf16.msra.mxu0 %v616
        %698 = vmatprep.subr.bf16.mxu0 0
        %699 = vmatpush2.bf16.msra.mxu0 %v615
        %700 = vmatprep.subr.bf16.mxu0 0
        %701 = vmatpush2.bf16.msra.mxu0 %v614
        %702 = vmatprep.mubr.bf16.mxu0 %v319
        %703 = vmatmul.mubr.bf16.gmra.mxu0 %v318
        %v704 = vpop.f32.mrf.mxu0
        %v705 = vadd.f32 0.0, %v704
        %v706 = vpop.f32.mrf.mxu0
        %v707 = vpop.f32.mrf.mxu0
        %v708 = vadd.f32 0.0, %v707
        %v709 = vpop.f32.mrf.mxu0
        %710 = vmatprep.mubr.bf16.mxu0 %v323
        %711 = vmatmul.mubr.bf16.gmra.mxu0 %v322
        %v712 = vpop.f32.mrf.mxu0
        %v713 = vadd.f32 0.0, %v712
        %v714 = vpop.f32.mrf.mxu0
        %v715 = vpop.f32.mrf.mxu0
        %v716 = vadd.f32 0.0, %v715
        %v717 = vpop.f32.mrf.mxu0
        %718 = vmatprep.mubr.bf16.mxu0 %v327
        %719 = vmatmul.mubr.bf16.gmra.mxu0 %v326
        %v720 = vpop.f32.mrf.mxu0
        %v721 = vadd.f32 0.0, %v720
        %v722 = vpop.f32.mrf.mxu0
        %v723 = vpop.f32.mrf.mxu0
        %v724 = vadd.f32 0.0, %v723
        %v725 = vpop.f32.mrf.mxu0
        %726 = vmatprep.mubr.bf16.mxu0 %v331
        %727 = vmatmul.mubr.bf16.gmra.mxu0 %v330
        %v728 = vpop.f32.mrf.mxu0
        %v729 = vadd.f32 0.0, %v728
        %v730 = vpop.f32.mrf.mxu0
        %v731 = vpop.f32.mrf.mxu0
        %v732 = vadd.f32 0.0, %v731
        %v733 = vpop.f32.mrf.mxu0
        %734 = vmatprep.mubr.bf16.mxu0 %v335
        %735 = vmatmul.mubr.bf16.gmra.mxu0 %v334
        %v736 = vpop.f32.mrf.mxu0
        %v737 = vadd.f32 0.0, %v736
        %v738 = vpop.f32.mrf.mxu0
        %v739 = vpop.f32.mrf.mxu0
        %v740 = vadd.f32 0.0, %v739
        %v741 = vpop.f32.mrf.mxu0
        %742 = vmatprep.mubr.bf16.mxu0 %v339
        %743 = vmatmul.mubr.bf16.gmra.mxu0 %v338
        %v744 = vpop.f32.mrf.mxu0
        %v745 = vadd.f32 0.0, %v744
        %v746 = vpop.f32.mrf.mxu0
        %v747 = vpop.f32.mrf.mxu0
        %v748 = vadd.f32 0.0, %v747
        %v749 = vpop.f32.mrf.mxu0
        %750 = vmatprep.mubr.bf16.mxu0 %v343
        %751 = vmatmul.mubr.bf16.gmra.mxu0 %v342
        %v752 = vpop.f32.mrf.mxu0
        %v753 = vadd.f32 0.0, %v752
        %v754 = vpop.f32.mrf.mxu0
        %v755 = vpop.f32.mrf.mxu0
        %v756 = vadd.f32 0.0, %v755
        %v757 = vpop.f32.mrf.mxu0
        %758 = vmatprep.mubr.bf16.mxu0 %v347
        %759 = vmatmul.mubr.bf16.gmra.mxu0 %v346
        %v760 = vpop.f32.mrf.mxu0
        %v761 = vadd.f32 0.0, %v760
        %v762 = vpop.f32.mrf.mxu0
        %v763 = vpop.f32.mrf.mxu0
        %v764 = vadd.f32 0.0, %v763
        %v765 = vpop.f32.mrf.mxu0
        %766 = vmatprep.mubr.bf16.mxu0 %v351
        %767 = vmatmul.mubr.bf16.gmra.mxu0 %v350
        %v768 = vpop.f32.mrf.mxu0
        %v769 = vadd.f32 0.0, %v768
        %v770 = vpop.f32.mrf.mxu0
        %v771 = vpop.f32.mrf.mxu0
        %v772 = vadd.f32 0.0, %v771
        %v773 = vpop.f32.mrf.mxu0
        %774 = vmatprep.mubr.bf16.mxu0 %v355
        %775 = vmatmul.mubr.bf16.gmra.mxu0 %v354
        %v776 = vpop.f32.mrf.mxu0
        %v777 = vadd.f32 0.0, %v776
        %v778 = vpop.f32.mrf.mxu0
        %v779 = vpop.f32.mrf.mxu0
        %v780 = vadd.f32 0.0, %v779
        %v781 = vpop.f32.mrf.mxu0
        %782 = vmatprep.mubr.bf16.mxu0 %v359
        %783 = vmatmul.mubr.bf16.gmra.mxu0 %v358
        %v784 = vpop.f32.mrf.mxu0
        %v785 = vadd.f32 0.0, %v784
        %v786 = vpop.f32.mrf.mxu0
        %v787 = vpop.f32.mrf.mxu0
        %v788 = vadd.f32 0.0, %v787
        %v789 = vpop.f32.mrf.mxu0
        %790 = vmatprep.mubr.bf16.mxu0 %v363
        %791 = vmatmul.mubr.bf16.gmra.mxu0 %v362
        %v792 = vpop.f32.mrf.mxu0
        %v793 = vadd.f32 0.0, %v792
        %v794 = vpop.f32.mrf.mxu0
        %v795 = vpop.f32.mrf.mxu0
        %v796 = vadd.f32 0.0, %v795
        %v797 = vpop.f32.mrf.mxu0
        %798 = vmatprep.mubr.bf16.mxu0 %v367
        %799 = vmatmul.mubr.bf16.gmra.mxu0 %v366
        %v800 = vpop.f32.mrf.mxu0
        %v801 = vadd.f32 0.0, %v800
        %v802 = vpop.f32.mrf.mxu0
        %v803 = vpop.f32.mrf.mxu0
        %v804 = vadd.f32 0.0, %v803
        %v805 = vpop.f32.mrf.mxu0
        %806 = vmatprep.mubr.bf16.mxu0 %v371
        %807 = vmatmul.mubr.bf16.gmra.mxu0 %v370
        %v808 = vpop.f32.mrf.mxu0
        %v809 = vadd.f32 0.0, %v808
        %v810 = vpop.f32.mrf.mxu0
        %v811 = vpop.f32.mrf.mxu0
        %v812 = vadd.f32 0.0, %v811
        %v813 = vpop.f32.mrf.mxu0
        %814 = vmatprep.mubr.bf16.mxu0 %v375
        %815 = vmatmul.mubr.bf16.gmra.mxu0 %v374
        %v816 = vpop.f32.mrf.mxu0
        %v817 = vadd.f32 0.0, %v816
        %v818 = vpop.f32.mrf.mxu0
        %v819 = vpop.f32.mrf.mxu0
        %v820 = vadd.f32 0.0, %v819
        %v821 = vpop.f32.mrf.mxu0
        %822 = vmatprep.mubr.bf16.mxu0 %v379
        %823 = vmatmul.mubr.bf16.gmra.mxu0 %v378
        %v824 = vpop.f32.mrf.mxu0
        %v825 = vadd.f32 0.0, %v824
        %v826 = vpop.f32.mrf.mxu0
        %v827 = vpop.f32.mrf.mxu0
        %v828 = vadd.f32 0.0, %v827
        %v829 = vpop.f32.mrf.mxu0
        %830 = vdwg.mxu0
        %831 = vmatprep.subr.bf16.mxu0 0
        %832 = vmatpush1.bf16.msra.mxu0 %v629
        %833 = vmatprep.subr.bf16.mxu0 0
        %834 = vmatpush1.bf16.msra.mxu0 %v628
        %835 = vmatprep.subr.bf16.mxu0 0
        %836 = vmatpush1.bf16.msra.mxu0 %v627
        %837 = vmatprep.subr.bf16.mxu0 0
        %838 = vmatpush1.bf16.msra.mxu0 %v626
        %839 = vmatprep.subr.bf16.mxu0 0
        %840 = vmatpush1.bf16.msra.mxu0 %v625
        %841 = vmatprep.subr.bf16.mxu0 0
        %842 = vmatpush1.bf16.msra.mxu0 %v624
        %843 = vmatprep.subr.bf16.mxu0 0
        %844 = vmatpush1.bf16.msra.mxu0 %v623
        %845 = vmatprep.subr.bf16.mxu0 0
        %846 = vmatpush1.bf16.msra.mxu0 %v622
        %847 = vmatprep.subr.bf16.mxu0 0
        %848 = vmatpush2.bf16.msra.mxu0 %v637
        %849 = vmatprep.subr.bf16.mxu0 0
        %850 = vmatpush2.bf16.msra.mxu0 %v636
        %851 = vmatprep.subr.bf16.mxu0 0
        %852 = vmatpush2.bf16.msra.mxu0 %v635
        %853 = vmatprep.subr.bf16.mxu0 0
        %854 = vmatpush2.bf16.msra.mxu0 %v634
        %855 = vmatprep.subr.bf16.mxu0 0
        %856 = vmatpush2.bf16.msra.mxu0 %v633
        %857 = vmatprep.subr.bf16.mxu0 0
        %858 = vmatpush2.bf16.msra.mxu0 %v632
        %859 = vmatprep.subr.bf16.mxu0 0
        %860 = vmatpush2.bf16.msra.mxu0 %v631
        %861 = vmatprep.subr.bf16.mxu0 0
        %862 = vmatpush2.bf16.msra.mxu0 %v630
        %863 = vmatprep.mubr.bf16.mxu0 %v321
        %864 = vmatmul.mubr.bf16.gmra.mxu0 %v320
        %v865 = vpop.f32.mrf.mxu0
        %v866 = vadd.f32 %v705, %v865
        %v867 = vpop.f32.mrf.mxu0
        %v868 = vpop.f32.mrf.mxu0
        %v869 = vadd.f32 %v708, %v868
        %v870 = vpop.f32.mrf.mxu0
        %871 = vmatprep.mubr.bf16.mxu0 %v325
        %872 = vmatmul.mubr.bf16.gmra.mxu0 %v324
        %v873 = vpop.f32.mrf.mxu0
        %v874 = vadd.f32 %v713, %v873
        %v875 = vpop.f32.mrf.mxu0
        %v876 = vpop.f32.mrf.mxu0
        %v877 = vadd.f32 %v716, %v876
        %v878 = vpop.f32.mrf.mxu0
        %879 = vmatprep.mubr.bf16.mxu0 %v329
        %880 = vmatmul.mubr.bf16.gmra.mxu0 %v328
        %v881 = vpop.f32.mrf.mxu0
        %v882 = vadd.f32 %v721, %v881
        %v883 = vpop.f32.mrf.mxu0
        %v884 = vpop.f32.mrf.mxu0
        %v885 = vadd.f32 %v724, %v884
        %v886 = vpop.f32.mrf.mxu0
        %887 = vmatprep.mubr.bf16.mxu0 %v333
        %888 = vmatmul.mubr.bf16.gmra.mxu0 %v332
        %v889 = vpop.f32.mrf.mxu0
        %v890 = vadd.f32 %v729, %v889
        %v891 = vpop.f32.mrf.mxu0
        %v892 = vpop.f32.mrf.mxu0
        %v893 = vadd.f32 %v732, %v892
        %v894 = vpop.f32.mrf.mxu0
        %895 = vmatprep.mubr.bf16.mxu0 %v337
        %896 = vmatmul.mubr.bf16.gmra.mxu0 %v336
        %v897 = vpop.f32.mrf.mxu0
        %v898 = vadd.f32 %v737, %v897
        %v899 = vpop.f32.mrf.mxu0
        %v900 = vpop.f32.mrf.mxu0
        %v901 = vadd.f32 %v740, %v900
        %v902 = vpop.f32.mrf.mxu0
        %903 = vmatprep.mubr.bf16.mxu0 %v341
        %904 = vmatmul.mubr.bf16.gmra.mxu0 %v340
        %v905 = vpop.f32.mrf.mxu0
        %v906 = vadd.f32 %v745, %v905
        %v907 = vpop.f32.mrf.mxu0
        %v908 = vpop.f32.mrf.mxu0
        %v909 = vadd.f32 %v748, %v908
        %v910 = vpop.f32.mrf.mxu0
        %911 = vmatprep.mubr.bf16.mxu0 %v345
        %912 = vmatmul.mubr.bf16.gmra.mxu0 %v344
        %v913 = vpop.f32.mrf.mxu0
        %v914 = vadd.f32 %v753, %v913
        %v915 = vpop.f32.mrf.mxu0
        %v916 = vpop.f32.mrf.mxu0
        %v917 = vadd.f32 %v756, %v916
        %v918 = vpop.f32.mrf.mxu0
        %919 = vmatprep.mubr.bf16.mxu0 %v349
        %920 = vmatmul.mubr.bf16.gmra.mxu0 %v348
        %v921 = vpop.f32.mrf.mxu0
        %v922 = vadd.f32 %v761, %v921
        %v923 = vpop.f32.mrf.mxu0
        %v924 = vpop.f32.mrf.mxu0
        %v925 = vadd.f32 %v764, %v924
        %v926 = vpop.f32.mrf.mxu0
        %927 = vmatprep.mubr.bf16.mxu0 %v353
        %928 = vmatmul.mubr.bf16.gmra.mxu0 %v352
        %v929 = vpop.f32.mrf.mxu0
        %v930 = vadd.f32 %v769, %v929
        %v931 = vpop.f32.mrf.mxu0
        %v932 = vpop.f32.mrf.mxu0
        %v933 = vadd.f32 %v772, %v932
        %v934 = vpop.f32.mrf.mxu0
        %935 = vmatprep.mubr.bf16.mxu0 %v357
        %936 = vmatmul.mubr.bf16.gmra.mxu0 %v356
        %v937 = vpop.f32.mrf.mxu0
        %v938 = vadd.f32 %v777, %v937
        %v939 = vpop.f32.mrf.mxu0
        %v940 = vpop.f32.mrf.mxu0
        %v941 = vadd.f32 %v780, %v940
        %v942 = vpop.f32.mrf.mxu0
        %943 = vmatprep.mubr.bf16.mxu0 %v361
        %944 = vmatmul.mubr.bf16.gmra.mxu0 %v360
        %v945 = vpop.f32.mrf.mxu0
        %v946 = vadd.f32 %v785, %v945
        %v947 = vpop.f32.mrf.mxu0
        %v948 = vpop.f32.mrf.mxu0
        %v949 = vadd.f32 %v788, %v948
        %v950 = vpop.f32.mrf.mxu0
        %951 = vmatprep.mubr.bf16.mxu0 %v365
        %952 = vmatmul.mubr.bf16.gmra.mxu0 %v364
        %v953 = vpop.f32.mrf.mxu0
        %v954 = vadd.f32 %v793, %v953
        %v955 = vpop.f32.mrf.mxu0
        %v956 = vpop.f32.mrf.mxu0
        %v957 = vadd.f32 %v796, %v956
        %v958 = vpop.f32.mrf.mxu0
        %959 = vmatprep.mubr.bf16.mxu0 %v369
        %960 = vmatmul.mubr.bf16.gmra.mxu0 %v368
        %v961 = vpop.f32.mrf.mxu0
        %v962 = vadd.f32 %v801, %v961
        %v963 = vpop.f32.mrf.mxu0
        %v964 = vpop.f32.mrf.mxu0
        %v965 = vadd.f32 %v804, %v964
        %v966 = vpop.f32.mrf.mxu0
        %967 = vmatprep.mubr.bf16.mxu0 %v373
        %968 = vmatmul.mubr.bf16.gmra.mxu0 %v372
        %v969 = vpop.f32.mrf.mxu0
        %v970 = vadd.f32 %v809, %v969
        %v971 = vpop.f32.mrf.mxu0
        %v972 = vpop.f32.mrf.mxu0
        %v973 = vadd.f32 %v812, %v972
        %v974 = vpop.f32.mrf.mxu0
        %975 = vmatprep.mubr.bf16.mxu0 %v377
        %976 = vmatmul.mubr.bf16.gmra.mxu0 %v376
        %v977 = vpop.f32.mrf.mxu0
        %v978 = vadd.f32 %v817, %v977
        %v979 = vpop.f32.mrf.mxu0
        %v980 = vpop.f32.mrf.mxu0
        %v981 = vadd.f32 %v820, %v980
        %v982 = vpop.f32.mrf.mxu0
        %983 = vmatprep.mubr.bf16.mxu0 %v381
        %984 = vmatmul.mubr.bf16.gmra.mxu0 %v380
        %v985 = vpop.f32.mrf.mxu0
        %v986 = vadd.f32 %v825, %v985
        %v987 = vpop.f32.mrf.mxu0
        %v988 = vpop.f32.mrf.mxu0
        %v989 = vadd.f32 %v828, %v988
        %v990 = vpop.f32.mrf.mxu0
        %991 = vdwg.mxu0
        %v992 = vadd.f32 %v382, %v866
        %v993 = vadd.f32 %v383, %v869
        %v994 = vadd.f32 %v384, %v874
        %v995 = vadd.f32 %v385, %v877
        %v996 = vadd.f32 %v386, %v882
        %v997 = vadd.f32 %v387, %v885
        %v998 = vadd.f32 %v388, %v890
        %v999 = vadd.f32 %v389, %v893
        %v1000 = vadd.f32 %v390, %v898
        %v1001 = vadd.f32 %v391, %v901
        %v1002 = vadd.f32 %v392, %v906
        %v1003 = vadd.f32 %v393, %v909
        %v1004 = vadd.f32 %v394, %v914
        %v1005 = vadd.f32 %v395, %v917
        %v1006 = vadd.f32 %v396, %v922
        %v1007 = vadd.f32 %v397, %v925
        %v1008 = vadd.f32 %v398, %v930
        %v1009 = vadd.f32 %v399, %v933
        %v1010 = vadd.f32 %v400, %v938
        %v1011 = vadd.f32 %v401, %v941
        %v1012 = vadd.f32 %v402, %v946
        %v1013 = vadd.f32 %v403, %v949
        %v1014 = vadd.f32 %v404, %v954
        %v1015 = vadd.f32 %v405, %v957
        %v1016 = vadd.f32 %v406, %v962
        %v1017 = vadd.f32 %v407, %v965
        %v1018 = vadd.f32 %v408, %v970
        %v1019 = vadd.f32 %v409, %v973
        %v1020 = vadd.f32 %v410, %v978
        %v1021 = vadd.f32 %v411, %v981
        %v1022 = vadd.f32 %v412, %v986
        %v1023 = vadd.f32 %v413, %v989
        %1024 = vst [vmem:[%s228] sm:$0xff] %v992
        %1025 = vst [vmem:[%s228 + $0x8] sm:$0xff] %v993
        %1026 = vst [vmem:[%s228 + $0x10] sm:$0xff] %v994
        %1027 = vst [vmem:[%s228 + $0x18] sm:$0xff] %v995
        %1028 = vst [vmem:[%s228 + $0x20] sm:$0xff] %v996
        %1029 = vst [vmem:[%s228 + $0x28] sm:$0xff] %v997
        %1030 = vst [vmem:[%s228 + $0x30] sm:$0xff] %v998
        %1031 = vst [vmem:[%s228 + $0x38] sm:$0xff] %v999
        %1032 = vst [vmem:[%s228 + $0x40] sm:$0xff] %v1000
        %1033 = vst [vmem:[%s228 + $0x48] sm:$0xff] %v1001
        %1034 = vst [vmem:[%s228 + $0x50] sm:$0xff] %v1002
        %1035 = vst [vmem:[%s228 + $0x58] sm:$0xff] %v1003
        %1036 = vst [vmem:[%s228 + $0x60] sm:$0xff] %v1004
        %1037 = vst [vmem:[%s228 + $0x68] sm:$0xff] %v1005
        %1038 = vst [vmem:[%s228 + $0x70] sm:$0xff] %v1006
        %1039 = vst [vmem:[%s228 + $0x78] sm:$0xff] %v1007
        %1040 = vst [vmem:[%s228 + $0x80] sm:$0xff] %v1008
        %1041 = vst [vmem:[%s228 + $0x88] sm:$0xff] %v1009
        %1042 = vst [vmem:[%s228 + $0x90] sm:$0xff] %v1010
        %1043 = vst [vmem:[%s228 + $0x98] sm:$0xff] %v1011
        %1044 = vst [vmem:[%s228 + $0xa0] sm:$0xff] %v1012
        %1045 = vst [vmem:[%s228 + $0xa8] sm:$0xff] %v1013
        %1046 = vst [vmem:[%s228 + $0xb0] sm:$0xff] %v1014
        %1047 = vst [vmem:[%s228 + $0xb8] sm:$0xff] %v1015
        %1048 = vst [vmem:[%s228 + $0xc0] sm:$0xff] %v1016
        %1049 = vst [vmem:[%s228 + $0xc8] sm:$0xff] %v1017
        %1050 = vst [vmem:[%s228 + $0xd0] sm:$0xff] %v1018
        %1051 = vst [vmem:[%s228 + $0xd8] sm:$0xff] %v1019
        %1052 = vst [vmem:[%s228 + $0xe0] sm:$0xff] %v1020
        %1053 = vst [vmem:[%s228 + $0xe8] sm:$0xff] %v1021
        %1054 = vst [vmem:[%s228 + $0xf0] sm:$0xff] %v1022
        %1055 = vst [vmem:[%s228 + $0xf8] sm:$0xff] %v1023
        // Predicated region
        $region41: #{tpu_custom_call.1} parent=31 // pred_check
          %p1056 = pneg %p250
        $region42: #{tpu_custom_call.1} parent=31 // pred_check_branch
          %1058 = sbr.rel (%p1056) target = $region44
        $region43: #{tpu_custom_call.1} parent=31 // pred_region
          %v1059 = vld [vmem:[%s228] sm:$0xff]
          %v1060 = vld [vmem:[%s228 + $0x8] sm:$0xff]
          %v1061 = vld [vmem:[%s228 + $0x10] sm:$0xff]
          %v1062 = vld [vmem:[%s228 + $0x18] sm:$0xff]
          %v1063 = vld [vmem:[%s228 + $0x20] sm:$0xff]
          %v1064 = vld [vmem:[%s228 + $0x28] sm:$0xff]
          %v1065 = vld [vmem:[%s228 + $0x30] sm:$0xff]
          %v1066 = vld [vmem:[%s228 + $0x38] sm:$0xff]
          %v1067 = vld [vmem:[%s228 + $0x40] sm:$0xff]
          %v1068 = vld [vmem:[%s228 + $0x48] sm:$0xff]
          %v1069 = vld [vmem:[%s228 + $0x50] sm:$0xff]
          %v1070 = vld [vmem:[%s228 + $0x58] sm:$0xff]
          %v1071 = vld [vmem:[%s228 + $0x60] sm:$0xff]
          %v1072 = vld [vmem:[%s228 + $0x68] sm:$0xff]
          %v1073 = vld [vmem:[%s228 + $0x70] sm:$0xff]
          %v1074 = vld [vmem:[%s228 + $0x78] sm:$0xff]
          %v1075 = vld [vmem:[%s228 + $0x80] sm:$0xff]
          %v1076 = vld [vmem:[%s228 + $0x88] sm:$0xff]
          %v1077 = vld [vmem:[%s228 + $0x90] sm:$0xff]
          %v1078 = vld [vmem:[%s228 + $0x98] sm:$0xff]
          %v1079 = vld [vmem:[%s228 + $0xa0] sm:$0xff]
          %v1080 = vld [vmem:[%s228 + $0xa8] sm:$0xff]
          %v1081 = vld [vmem:[%s228 + $0xb0] sm:$0xff]
          %v1082 = vld [vmem:[%s228 + $0xb8] sm:$0xff]
          %v1083 = vld [vmem:[%s228 + $0xc0] sm:$0xff]
          %v1084 = vld [vmem:[%s228 + $0xc8] sm:$0xff]
          %v1085 = vld [vmem:[%s228 + $0xd0] sm:$0xff]
          %v1086 = vld [vmem:[%s228 + $0xd8] sm:$0xff]
          %v1087 = vld [vmem:[%s228 + $0xe0] sm:$0xff]
          %v1088 = vld [vmem:[%s228 + $0xe8] sm:$0xff]
          %v1089 = vld [vmem:[%s228 + $0xf0] sm:$0xff]
          %v1090 = vld [vmem:[%s228 + $0xf8] sm:$0xff]
          %v1091 = vld [vmem:[%s246] sm:$0xff]
          %v1092 = vld [vmem:[%s246 + $0x8] sm:$0xff]
          %v1093 = vld [vmem:[%s246 + $0x10] sm:$0xff]
          %v1094 = vld [vmem:[%s246 + $0x18] sm:$0xff]
          %v1095 = vld [vmem:[%s246 + $0x20] sm:$0xff]
          %v1096 = vld [vmem:[%s246 + $0x28] sm:$0xff]
          %v1097 = vld [vmem:[%s246 + $0x30] sm:$0xff]
          %v1098 = vld [vmem:[%s246 + $0x38] sm:$0xff]
          %v1099 = vld [vmem:[%s246 + $0x40] sm:$0xff]
          %v1100 = vld [vmem:[%s246 + $0x48] sm:$0xff]
          %v1101 = vld [vmem:[%s246 + $0x50] sm:$0xff]
          %v1102 = vld [vmem:[%s246 + $0x58] sm:$0xff]
          %v1103 = vld [vmem:[%s246 + $0x60] sm:$0xff]
          %v1104 = vld [vmem:[%s246 + $0x68] sm:$0xff]
          %v1105 = vld [vmem:[%s246 + $0x70] sm:$0xff]
          %v1106 = vld [vmem:[%s246 + $0x78] sm:$0xff]
          %v1107 = vld [vmem:[%s246 + $0x80] sm:$0xff]
          %v1108 = vld [vmem:[%s246 + $0x88] sm:$0xff]
          %v1109 = vld [vmem:[%s246 + $0x90] sm:$0xff]
          %v1110 = vld [vmem:[%s246 + $0x98] sm:$0xff]
          %v1111 = vld [vmem:[%s246 + $0xa0] sm:$0xff]
          %v1112 = vld [vmem:[%s246 + $0xa8] sm:$0xff]
          %v1113 = vld [vmem:[%s246 + $0xb0] sm:$0xff]
          %v1114 = vld [vmem:[%s246 + $0xb8] sm:$0xff]
          %v1115 = vld [vmem:[%s246 + $0xc0] sm:$0xff]
          %v1116 = vld [vmem:[%s246 + $0xc8] sm:$0xff]
          %v1117 = vld [vmem:[%s246 + $0xd0] sm:$0xff]
          %v1118 = vld [vmem:[%s246 + $0xd8] sm:$0xff]
          %v1119 = vld [vmem:[%s246 + $0xe0] sm:$0xff]
          %v1120 = vld [vmem:[%s246 + $0xe8] sm:$0xff]
          %v1121 = vld [vmem:[%s246 + $0xf0] sm:$0xff]
          %v1122 = vld [vmem:[%s246 + $0xf8] sm:$0xff]
          %1124 = vset.pattern.permute.xlu0 0
          %1125 = vperm.xlu0 %1124, %v1091
          %v1126 = vpop.permute.xlu0 %1125
          %1129 = vset.pattern.permute.xlu0 0
          %1130 = vperm.xlu0 %1129, %v1092
          %v1131 = vpop.permute.xlu0 %1130
          %1134 = vset.pattern.permute.xlu0 0
          %1135 = vperm.xlu0 %1134, %v1093
          %v1136 = vpop.permute.xlu0 %1135
          %1139 = vset.pattern.permute.xlu0 0
          %1140 = vperm.xlu0 %1139, %v1094
          %v1141 = vpop.permute.xlu0 %1140
          %1144 = vset.pattern.permute.xlu0 0
          %1145 = vperm.xlu0 %1144, %v1095
          %v1146 = vpop.permute.xlu0 %1145
          %1149 = vset.pattern.permute.xlu0 0
          %1150 = vperm.xlu0 %1149, %v1096
          %v1151 = vpop.permute.xlu0 %1150
          %1154 = vset.pattern.permute.xlu0 0
          %1155 = vperm.xlu0 %1154, %v1097
          %v1156 = vpop.permute.xlu0 %1155
          %1159 = vset.pattern.permute.xlu0 0
          %1160 = vperm.xlu0 %1159, %v1098
          %v1161 = vpop.permute.xlu0 %1160
          %1164 = vset.pattern.permute.xlu0 0
          %1165 = vperm.xlu0 %1164, %v1099
          %v1166 = vpop.permute.xlu0 %1165
          %1169 = vset.pattern.permute.xlu0 0
          %1170 = vperm.xlu0 %1169, %v1100
          %v1171 = vpop.permute.xlu0 %1170
          %1174 = vset.pattern.permute.xlu0 0
          %1175 = vperm.xlu0 %1174, %v1101
          %v1176 = vpop.permute.xlu0 %1175
          %1179 = vset.pattern.permute.xlu0 0
          %1180 = vperm.xlu0 %1179, %v1102
          %v1181 = vpop.permute.xlu0 %1180
          %1184 = vset.pattern.permute.xlu0 0
          %1185 = vperm.xlu0 %1184, %v1103
          %v1186 = vpop.permute.xlu0 %1185
          %1189 = vset.pattern.permute.xlu0 0
          %1190 = vperm.xlu0 %1189, %v1104
          %v1191 = vpop.permute.xlu0 %1190
          %1194 = vset.pattern.permute.xlu0 0
          %1195 = vperm.xlu0 %1194, %v1105
          %v1196 = vpop.permute.xlu0 %1195
          %1199 = vset.pattern.permute.xlu0 0
          %1200 = vperm.xlu0 %1199, %v1106
          %v1201 = vpop.permute.xlu0 %1200
          %1204 = vset.pattern.permute.xlu0 0
          %1205 = vperm.xlu0 %1204, %v1107
          %v1206 = vpop.permute.xlu0 %1205
          %1209 = vset.pattern.permute.xlu0 0
          %1210 = vperm.xlu0 %1209, %v1108
          %v1211 = vpop.permute.xlu0 %1210
          %1214 = vset.pattern.permute.xlu0 0
          %1215 = vperm.xlu0 %1214, %v1109
          %v1216 = vpop.permute.xlu0 %1215
          %1219 = vset.pattern.permute.xlu0 0
          %1220 = vperm.xlu0 %1219, %v1110
          %v1221 = vpop.permute.xlu0 %1220
          %1224 = vset.pattern.permute.xlu0 0
          %1225 = vperm.xlu0 %1224, %v1111
          %v1226 = vpop.permute.xlu0 %1225
          %1229 = vset.pattern.permute.xlu0 0
          %1230 = vperm.xlu0 %1229, %v1112
          %v1231 = vpop.permute.xlu0 %1230
          %1234 = vset.pattern.permute.xlu0 0
          %1235 = vperm.xlu0 %1234, %v1113
          %v1236 = vpop.permute.xlu0 %1235
          %1239 = vset.pattern.permute.xlu0 0
          %1240 = vperm.xlu0 %1239, %v1114
          %v1241 = vpop.permute.xlu0 %1240
          %1244 = vset.pattern.permute.xlu0 0
          %1245 = vperm.xlu0 %1244, %v1115
          %v1246 = vpop.permute.xlu0 %1245
          %1249 = vset.pattern.permute.xlu0 0
          %1250 = vperm.xlu0 %1249, %v1116
          %v1251 = vpop.permute.xlu0 %1250
          %1254 = vset.pattern.permute.xlu0 0
          %1255 = vperm.xlu0 %1254, %v1117
          %v1256 = vpop.permute.xlu0 %1255
          %1259 = vset.pattern.permute.xlu0 0
          %1260 = vperm.xlu0 %1259, %v1118
          %v1261 = vpop.permute.xlu0 %1260
          %1264 = vset.pattern.permute.xlu0 0
          %1265 = vperm.xlu0 %1264, %v1119
          %v1266 = vpop.permute.xlu0 %1265
          %1269 = vset.pattern.permute.xlu0 0
          %1270 = vperm.xlu0 %1269, %v1120
          %v1271 = vpop.permute.xlu0 %1270
          %1274 = vset.pattern.permute.xlu0 0
          %1275 = vperm.xlu0 %1274, %v1121
          %v1276 = vpop.permute.xlu0 %1275
          %1279 = vset.pattern.permute.xlu0 0
          %1280 = vperm.xlu0 %1279, %v1122
          %v1281 = vpop.permute.xlu0 %1280
          %v1283 = vmul.f32 %v1059, %v1126
          %v1284 = vmul.f32 %v1060, %v1131
          %v1285 = vmul.f32 %v1061, %v1136
          %v1286 = vmul.f32 %v1062, %v1141
          %v1287 = vmul.f32 %v1063, %v1146
          %v1288 = vmul.f32 %v1064, %v1151
          %v1289 = vmul.f32 %v1065, %v1156
          %v1290 = vmul.f32 %v1066, %v1161
          %v1291 = vmul.f32 %v1067, %v1166
          %v1292 = vmul.f32 %v1068, %v1171
          %v1293 = vmul.f32 %v1069, %v1176
          %v1294 = vmul.f32 %v1070, %v1181
          %v1295 = vmul.f32 %v1071, %v1186
          %v1296 = vmul.f32 %v1072, %v1191
          %v1297 = vmul.f32 %v1073, %v1196
          %v1298 = vmul.f32 %v1074, %v1201
          %v1299 = vmul.f32 %v1075, %v1206
          %v1300 = vmul.f32 %v1076, %v1211
          %v1301 = vmul.f32 %v1077, %v1216
          %v1302 = vmul.f32 %v1078, %v1221
          %v1303 = vmul.f32 %v1079, %v1226
          %v1304 = vmul.f32 %v1080, %v1231
          %v1305 = vmul.f32 %v1081, %v1236
          %v1306 = vmul.f32 %v1082, %v1241
          %v1307 = vmul.f32 %v1083, %v1246
          %v1308 = vmul.f32 %v1084, %v1251
          %v1309 = vmul.f32 %v1085, %v1256
          %v1310 = vmul.f32 %v1086, %v1261
          %v1311 = vmul.f32 %v1087, %v1266
          %v1312 = vmul.f32 %v1088, %v1271
          %v1313 = vmul.f32 %v1089, %v1276
          %v1314 = vmul.f32 %v1090, %v1281
          %vm1315 = vcmp.ge.f32.partialorder %v1283, 0.0
          %vm1316 = vcmp.ge.f32.partialorder %v1284, 0.0
          %vm1317 = vcmp.ge.f32.partialorder %v1285, 0.0
          %vm1318 = vcmp.ge.f32.partialorder %v1286, 0.0
          %vm1319 = vcmp.ge.f32.partialorder %v1287, 0.0
          %vm1320 = vcmp.ge.f32.partialorder %v1288, 0.0
          %vm1321 = vcmp.ge.f32.partialorder %v1289, 0.0
          %vm1322 = vcmp.ge.f32.partialorder %v1290, 0.0
          %vm1323 = vcmp.ge.f32.partialorder %v1291, 0.0
          %vm1324 = vcmp.ge.f32.partialorder %v1292, 0.0
          %vm1325 = vcmp.ge.f32.partialorder %v1293, 0.0
          %vm1326 = vcmp.ge.f32.partialorder %v1294, 0.0
          %vm1327 = vcmp.ge.f32.partialorder %v1295, 0.0
          %vm1328 = vcmp.ge.f32.partialorder %v1296, 0.0
          %vm1329 = vcmp.ge.f32.partialorder %v1297, 0.0
          %vm1330 = vcmp.ge.f32.partialorder %v1298, 0.0
          %vm1331 = vcmp.ge.f32.partialorder %v1299, 0.0
          %vm1332 = vcmp.ge.f32.partialorder %v1300, 0.0
          %vm1333 = vcmp.ge.f32.partialorder %v1301, 0.0
          %vm1334 = vcmp.ge.f32.partialorder %v1302, 0.0
          %vm1335 = vcmp.ge.f32.partialorder %v1303, 0.0
          %vm1336 = vcmp.ge.f32.partialorder %v1304, 0.0
          %vm1337 = vcmp.ge.f32.partialorder %v1305, 0.0
          %vm1338 = vcmp.ge.f32.partialorder %v1306, 0.0
          %vm1339 = vcmp.ge.f32.partialorder %v1307, 0.0
          %vm1340 = vcmp.ge.f32.partialorder %v1308, 0.0
          %vm1341 = vcmp.ge.f32.partialorder %v1309, 0.0
          %vm1342 = vcmp.ge.f32.partialorder %v1310, 0.0
          %vm1343 = vcmp.ge.f32.partialorder %v1311, 0.0
          %vm1344 = vcmp.ge.f32.partialorder %v1312, 0.0
          %vm1345 = vcmp.ge.f32.partialorder %v1313, 0.0
          %vm1346 = vcmp.ge.f32.partialorder %v1314, 0.0
          %v1347 = vmul.f32 %v1283, 0.01
          %v1348 = vmul.f32 %v1284, 0.01
          %v1349 = vmul.f32 %v1285, 0.01
          %v1350 = vmul.f32 %v1286, 0.01
          %v1351 = vmul.f32 %v1287, 0.01
          %v1352 = vmul.f32 %v1288, 0.01
          %v1353 = vmul.f32 %v1289, 0.01
          %v1354 = vmul.f32 %v1290, 0.01
          %v1355 = vmul.f32 %v1291, 0.01
          %v1356 = vmul.f32 %v1292, 0.01
          %v1357 = vmul.f32 %v1293, 0.01
          %v1358 = vmul.f32 %v1294, 0.01
          %v1359 = vmul.f32 %v1295, 0.01
          %v1360 = vmul.f32 %v1296, 0.01
          %v1361 = vmul.f32 %v1297, 0.01
          %v1362 = vmul.f32 %v1298, 0.01
          %v1363 = vmul.f32 %v1299, 0.01
          %v1364 = vmul.f32 %v1300, 0.01
          %v1365 = vmul.f32 %v1301, 0.01
          %v1366 = vmul.f32 %v1302, 0.01
          %v1367 = vmul.f32 %v1303, 0.01
          %v1368 = vmul.f32 %v1304, 0.01
          %v1369 = vmul.f32 %v1305, 0.01
          %v1370 = vmul.f32 %v1306, 0.01
          %v1371 = vmul.f32 %v1307, 0.01
          %v1372 = vmul.f32 %v1308, 0.01
          %v1373 = vmul.f32 %v1309, 0.01
          %v1374 = vmul.f32 %v1310, 0.01
          %v1375 = vmul.f32 %v1311, 0.01
          %v1376 = vmul.f32 %v1312, 0.01
          %v1377 = vmul.f32 %v1313, 0.01
          %v1378 = vmul.f32 %v1314, 0.01
          %v1379 = vsel %vm1315, %v1283, %v1347
          %v1380 = vsel %vm1316, %v1284, %v1348
          %v1381 = vsel %vm1317, %v1285, %v1349
          %v1382 = vsel %vm1318, %v1286, %v1350
          %v1383 = vsel %vm1319, %v1287, %v1351
          %v1384 = vsel %vm1320, %v1288, %v1352
          %v1385 = vsel %vm1321, %v1289, %v1353
          %v1386 = vsel %vm1322, %v1290, %v1354
          %v1387 = vsel %vm1323, %v1291, %v1355
          %v1388 = vsel %vm1324, %v1292, %v1356
          %v1389 = vsel %vm1325, %v1293, %v1357
          %v1390 = vsel %vm1326, %v1294, %v1358
          %v1391 = vsel %vm1327, %v1295, %v1359
          %v1392 = vsel %vm1328, %v1296, %v1360
          %v1393 = vsel %vm1329, %v1297, %v1361
          %v1394 = vsel %vm1330, %v1298, %v1362
          %v1395 = vsel %vm1331, %v1299, %v1363
          %v1396 = vsel %vm1332, %v1300, %v1364
          %v1397 = vsel %vm1333, %v1301, %v1365
          %v1398 = vsel %vm1334, %v1302, %v1366
          %v1399 = vsel %vm1335, %v1303, %v1367
          %v1400 = vsel %vm1336, %v1304, %v1368
          %v1401 = vsel %vm1337, %v1305, %v1369
          %v1402 = vsel %vm1338, %v1306, %v1370
          %v1403 = vsel %vm1339, %v1307, %v1371
          %v1404 = vsel %vm1340, %v1308, %v1372
          %v1405 = vsel %vm1341, %v1309, %v1373
          %v1406 = vsel %vm1342, %v1310, %v1374
          %v1407 = vsel %vm1343, %v1311, %v1375
          %v1408 = vsel %vm1344, %v1312, %v1376
          %v1409 = vsel %vm1345, %v1313, %v1377
          %v1410 = vsel %vm1346, %v1314, %v1378
          %1411 = vst [vmem:[%s228] sm:$0xff] %v1379
          %1412 = vst [vmem:[%s228 + $0x8] sm:$0xff] %v1380
          %1413 = vst [vmem:[%s228 + $0x10] sm:$0xff] %v1381
          %1414 = vst [vmem:[%s228 + $0x18] sm:$0xff] %v1382
          %1415 = vst [vmem:[%s228 + $0x20] sm:$0xff] %v1383
          %1416 = vst [vmem:[%s228 + $0x28] sm:$0xff] %v1384
          %1417 = vst [vmem:[%s228 + $0x30] sm:$0xff] %v1385
          %1418 = vst [vmem:[%s228 + $0x38] sm:$0xff] %v1386
          %1419 = vst [vmem:[%s228 + $0x40] sm:$0xff] %v1387
          %1420 = vst [vmem:[%s228 + $0x48] sm:$0xff] %v1388
          %1421 = vst [vmem:[%s228 + $0x50] sm:$0xff] %v1389
          %1422 = vst [vmem:[%s228 + $0x58] sm:$0xff] %v1390
          %1423 = vst [vmem:[%s228 + $0x60] sm:$0xff] %v1391
          %1424 = vst [vmem:[%s228 + $0x68] sm:$0xff] %v1392
          %1425 = vst [vmem:[%s228 + $0x70] sm:$0xff] %v1393
          %1426 = vst [vmem:[%s228 + $0x78] sm:$0xff] %v1394
          %1427 = vst [vmem:[%s228 + $0x80] sm:$0xff] %v1395
          %1428 = vst [vmem:[%s228 + $0x88] sm:$0xff] %v1396
          %1429 = vst [vmem:[%s228 + $0x90] sm:$0xff] %v1397
          %1430 = vst [vmem:[%s228 + $0x98] sm:$0xff] %v1398
          %1431 = vst [vmem:[%s228 + $0xa0] sm:$0xff] %v1399
          %1432 = vst [vmem:[%s228 + $0xa8] sm:$0xff] %v1400
          %1433 = vst [vmem:[%s228 + $0xb0] sm:$0xff] %v1401
          %1434 = vst [vmem:[%s228 + $0xb8] sm:$0xff] %v1402
          %1435 = vst [vmem:[%s228 + $0xc0] sm:$0xff] %v1403
          %1436 = vst [vmem:[%s228 + $0xc8] sm:$0xff] %v1404
          %1437 = vst [vmem:[%s228 + $0xd0] sm:$0xff] %v1405
          %1438 = vst [vmem:[%s228 + $0xd8] sm:$0xff] %v1406
          %1439 = vst [vmem:[%s228 + $0xe0] sm:$0xff] %v1407
          %1440 = vst [vmem:[%s228 + $0xe8] sm:$0xff] %v1408
          %1441 = vst [vmem:[%s228 + $0xf0] sm:$0xff] %v1409
          %1442 = vst [vmem:[%s228 + $0xf8] sm:$0xff] %v1410
        $region44: #{tpu_custom_call.1} parent=31 // pred_fallthru
          _
        %s1443 = sand.u32 %s118, 1
        %s1444 = scalar_lea.sflag [#allocation4], %s1443
        %s1445 = sand.u32 %s118, 1
        %s1446 = smul.addr %s1445, 256
        %s1447 = scalar_lea.vmem [#allocation5], %s1446
        // Predicated region
        $region45: #{tpu_custom_call.1} parent=31 // pred_check
          %p1448 = pneg %p128
        $region46: #{tpu_custom_call.1} parent=31 // pred_check_branch
          %1450 = sbr.rel (%p1448) target = $region48
        $region47: #{tpu_custom_call.1} parent=31 // pred_region
          %s1451 = smul.u32 32, %s22
          %s1453 = ssub.s32 4096, 4096
          %1454 = vsyncadd %s1444, %s1453
          %s1455 = smul.addr %s1451, 128
          %s1456 = scalar_lea.hbm %s3, %s1455
          %s1457 = sshll.u32 %s1447, 4
          %s1458 = int_to_ptr.vmem [resolvable:$true] %s1457
          %1463 = dma.vmem_to_hbm [thread:$0]  %s1458, 4096, %s1456, %s1444, 128, 128, 8
        $region48: #{tpu_custom_call.1} parent=31 // pred_fallthru
          _
      $region32: #{tpu_custom_call.1} parent=5 // pred_fallthru
        _
      %p1464 = scmp.le.s32.totalorder 2, %s13
      // Predicated region
      $region49: #{tpu_custom_call.1} parent=5 // pred_check
        %p1465 = pneg %p1464
      $region50: #{tpu_custom_call.1} parent=5 // pred_check_branch
        %1467 = sbr.rel (%p1465) target = $region52
      $region51: #{tpu_custom_call.1} parent=5 // pred_region
        %s1468 = ssub.s32 %s13, 2
        // Predicated region
        $region53: #{tpu_custom_call.1} parent=51 // pred_check
          %p1469 = pneg %p134
        $region54: #{tpu_custom_call.1} parent=51 // pred_check_branch
          %1471 = sbr.rel (%p1469) target = $region56
        $region55: #{tpu_custom_call.1} parent=51 // pred_region
          %s1472 = sand.u32 %s119, 1
          %s1473 = scalar_lea.sflag [#allocation4], %s1472
          %s1474 = sand.u32 %s119, 1
          %s1475 = smul.addr %s1474, 256
          %s1476 = scalar_lea.vmem [#allocation5], %s1475
          %1477 = dma.done %s1473, 4096
        $region56: #{tpu_custom_call.1} parent=51 // pred_fallthru
          _
      $region52: #{tpu_custom_call.1} parent=5 // pred_fallthru
        _
    $region6: #{tpu_custom_call.1} parent=1 // loop_footer
      %s17 = sadd.s32 1, %s13
    $region7: #{tpu_custom_call.1} parent=1 // loop_footer_branch
      %12 = sbr.rel target = $region3
    $region8: #{tpu_custom_call.1} parent=1 // loop_exit
      _
    %1478 = vsyncpa [#allocation3], 1
    %s1479 = scalar_lea.sflag [#allocation3], 1
    %1480 = vsyncpa %s1479, 1
    %1481 = vsyncpa [#allocation4], 1
    %s1482 = scalar_lea.sflag [#allocation4], 1
    %1483 = vsyncpa %s1482, 1

</llo_original>
